<compile_context>
chip_gen: v7x
topology: tpu7x:2x2x1
jax: 0.10.0
libtpu: 0.0.40
codegen_flags: <defaults>
</compile_context>

<pallas_src>
import jax
import jax.numpy as jnp
from jax.experimental import pallas as pl
from jax.experimental.pallas import tpu as pltpu


def _round_up(x, m):
    return (x + m - 1) // m * m


def _cfg_kernel(scale_sm,     # SMEM (B,)         f32   per-sample guidance scale
                x_ref,        # VMEM (1, Dp, Tt)  bf16  frames-on-lanes input block
                bias_u_ref,   # VMEM (1, Lp, 1)   f32   b1 + temb          (uncond)
                bias_c_ref,   # VMEM (1, Lp, 1)   f32   b1 + temb + cemb   (cond)
                w1t_ref,      # VMEM (Lp, Dp)     bf16  w1^T (resident)
                w2t_ref,      # VMEM (Dp, Lp)     bf16  w2^T (resident)
                b2_ref,       # VMEM (Dp, 1)      f32
                out_ref):     # VMEM (1, Dp, Tt)  f32
    b = pl.program_id(0)
    x = x_ref[0]                                                      # (Dp, Tt) bf16

    # Shared first matmul (identical for cond / uncond): bf16 MXU, f32 acc.
    h = jnp.dot(w1t_ref[...], x, preferred_element_type=jnp.float32)  # (Lp, Tt) f32

    # Branches differ only by the pre-folded per-batch bias columns.
    # TODO(synk): jax.nn.gelu(approximate=True) is the tanh approximation;
    # PyTorch nn.GELU defaults to exact erf — switch kernel AND reference if
    # fidelity to an erf-GELU inner model matters.
    h_u = jax.nn.gelu(h + bias_u_ref[0], approximate=True).astype(jnp.bfloat16)
    h_c = jax.nn.gelu(h + bias_c_ref[0], approximate=True).astype(jnp.bfloat16)

    # CFG combine on the hidden state.  The second layer is affine, so this is
    # exactly out_uncond + s*(out_cond - out_uncond) with a single second dot.
    # h_u / h_c are quantized to bf16 first (matches the two-call baseline's
    # per-branch MXU quantization); the combine itself stays f32.
    s = scale_sm[b]
    h_u_f = h_u.astype(jnp.float32)
    h_c_f = h_c.astype(jnp.float32)
    h_comb = h_u_f + s * (h_c_f - h_u_f)

    out = jnp.dot(w2t_ref[...], h_comb.astype(jnp.bfloat16),
                  preferred_element_type=jnp.float32) + b2_ref[...]   # (Dp, Tt) f32
    out_ref[0] = out                                                  # lane-dense store


def cfg_sample(x, timesteps, scale, cond_emb, params):
    """x: (B, J, F, T) float32.  Returns (B, J, F, T) float32."""
    B, J, Fd, T = x.shape
    D_in = J * Fd
    L = params["w1"].shape[1]
    Dp = _round_up(D_in, 128)
    Lp = _round_up(L, 128)

    # Frame tile: lane-dense, <= 256; take 256 only when it adds no padding.
    t_tile = 256 if _round_up(T, 256) == _round_up(T, 128) else 128
    Tp = _round_up(T, t_tile)
    n_t = Tp // t_tile

    # (B,J,F,T) -> (B,D_in,T) is a free reshape (no transpose).  Pad to
    # lane-dense (B,Dp,Tp) and cast to bf16 in the same copy (MXU input dtype).
    x_p = jnp.pad(x.reshape(B, D_in, T),
                  ((0, 0), (0, Dp - D_in), (0, Tp - T))).astype(jnp.bfloat16)

    # Fold b1 + timestep embedding (+ conditioning embedding) into per-batch
    # bias columns — tiny (B,Lp,1) arrays instead of (B*T,Lp) row slabs.
    temb = _timestep_embedding(timesteps, L)                  # (B, L)
    bias_u = params["b1"].reshape(1, L) + temb                # (B, L)  uncond
    bias_c = bias_u + cond_emb                                # (B, L)  cond
    bias_u_p = jnp.pad(bias_u, ((0, 0), (0, Lp - L)))[:, :, None]   # (B, Lp, 1)
    bias_c_p = jnp.pad(bias_c, ((0, 0), (0, Lp - L)))[:, :, None]

    # Weights: transpose once at trace time, pad lane-dense, cast to bf16.
    w1t = jnp.pad(params["w1"].T, ((0, Lp - L), (0, Dp - D_in))).astype(jnp.bfloat16)
    w2t = jnp.pad(params["w2"].T, ((0, Dp - D_in), (0, Lp - L))).astype(jnp.bfloat16)
    b2p = jnp.pad(params["b2"].reshape(D_in, 1), ((0, Dp - D_in), (0, 0)))

    scale_f = scale.astype(jnp.float32)                       # (B,) -> SMEM

    # Explicit VMEM budget (v5e scoped default 16 MiB; v7x physical 64 MiB).
    blk_bytes = (Dp * t_tile * 2 + Dp * t_tile * 4            # x / out blocks
                 + 2 * Lp * 128 * 4 + Dp * 128 * 4            # bias / b2 columns (lane-padded)
                 + 2 * Lp * Dp * 2)                           # w1^T, w2^T (bf16)
    vmem_limit = int(min(max(4 * blk_bytes, 8 << 20), 48 << 20))

    flops = 4 * B * Tp * Dp * Lp                              # shared dot + folded dot
    bytes_accessed = int(x_p.size * 2 + B * Dp * Tp * 4 + b2p.size * 4
                         + (bias_u_p.size + bias_c_p.size) * 4
                         + (w1t.size + w2t.size) * 2 + scale_f.size * 4)

    out_p = pl.pallas_call(
        _cfg_kernel,
        out_shape=jax.ShapeDtypeStruct((B, Dp, Tp), jnp.float32),
        grid_spec=pltpu.PrefetchScalarGridSpec(
            num_scalar_prefetch=1,                            # guidance scale -> SMEM
            grid=(B, n_t),
            in_specs=[
                pl.BlockSpec((1, Dp, t_tile), lambda b, t, s: (b, 0, t)),   # x block
                pl.BlockSpec((1, Lp, 1),      lambda b, t, s: (b, 0, 0)),   # uncond bias
                pl.BlockSpec((1, Lp, 1),      lambda b, t, s: (b, 0, 0)),   # cond bias
                pl.BlockSpec((Lp, Dp),        lambda b, t, s: (0, 0)),      # w1^T
                pl.BlockSpec((Dp, Lp),        lambda b, t, s: (0, 0)),      # w2^T
                pl.BlockSpec((Dp, 1),         lambda b, t, s: (0, 0)),      # b2
            ],
            out_specs=pl.BlockSpec((1, Dp, t_tile), lambda b, t, s: (b, 0, t)),
        ),
        compiler_params=pltpu.CompilerParams(
            dimension_semantics=("parallel", "parallel"),     # v7x: both TCs busy
            vmem_limit_bytes=vmem_limit),
        cost_estimate=pl.CostEstimate(
            flops=flops,
            transcendentals=2 * B * Tp * Lp,
            bytes_accessed=bytes_accessed),
    )(scale_f, x_p, bias_u_p, bias_c_p, w1t, w2t, b2p)

    # (B,Dp,Tp) -> (B,D_in,T) slice; reshape back to (B,J,F,T) is free.
    return out_p[:, :D_in, :T].reshape(B, J, Fd, T)


def _timestep_embedding(t, dim):
    half = dim // 2
    freqs = jnp.exp(-jnp.log(10000.0) * jnp.arange(half, dtype=jnp.float32) / half)
    args = t.astype(jnp.float32)[:, None] * freqs[None, :]
    emb = jnp.concatenate([jnp.cos(args), jnp.sin(args)], axis=-1)
    if dim % 2:                                   # keep width == dim for odd dims
        emb = jnp.pad(emb, ((0, 0), (0, 1)))
    return emb


def _reference(x, timesteps, scale, cond_emb, params, *, bf16_matmul, fold):
    """Pure-JAX reference for the ClassifierFreeSampleModel forward.

    fold=False reproduces the PyTorch wrapper literally (two model calls, CFG
    combine on the outputs).  fold=True applies the mathematically exact
    linearity fold at the kernel's precision (tight oracle for the kernel).
    """
    B, J, Fd, T = x.shape
    D_in = J * Fd
    L = params["w1"].shape[1]
    BT = B * T
    w1, w2 = params["w1"], params["w2"]
    b2 = params["b2"].reshape(1, D_in)

    x_rows = jnp.transpose(x.reshape(B, D_in, T), (0, 2, 1)).reshape(BT, D_in)
    temb = _timestep_embedding(timesteps, L)
    bias_u = params["b1"].reshape(1, L) + temb
    bias_c = bias_u + cond_emb
    rows = lambda a: jnp.broadcast_to(a[:, None, :], (B, T, L)).reshape(BT, L)
    s = jnp.broadcast_to(scale[:, None], (B, T)).reshape(BT, 1)

    def dot(a, b):
        if bf16_matmul:
            a = a.astype(jnp.bfloat16)
            b = b.astype(jnp.bfloat16)
        return jnp.dot(a, b, preferred_element_type=jnp.float32)

    h = dot(x_rows, w1)
    h_u = jax.nn.gelu(h + rows(bias_u), approximate=True)
    h_c = jax.nn.gelu(h + rows(bias_c), approximate=True)
    if fold:
        if bf16_matmul:     # mirror the kernel: quantize branches before combine
            h_u = h_u.astype(jnp.bfloat16).astype(jnp.float32)
            h_c = h_c.astype(jnp.bfloat16).astype(jnp.float32)
        comb = dot(h_u + s * (h_c - h_u), w2) + b2
    else:
        out_u = dot(h_u, w2) + b2                 # model(x, t, y_uncond)
        out_c = dot(h_c, w2) + b2                 # model(x, t, y)
        comb = out_u + s * (out_c - out_u)        # the module's forward
    return jnp.transpose(comb.reshape(B, T, D_in), (0, 2, 1)).reshape(B, J, Fd, T)


if __name__ == "__main__":
    # small shapes consistent with the module's 4D output / scale.view(-1,1,1,1)
    B, J, Fd, T = 2, 4, 4, 8          # batch, njoints, nfeats, nframes
    D_in = J * Fd                     # input_feats = 16
    L = 32                            # latent_dim

    key = jax.random.PRNGKey(0)
    kx, kc, kw1, kw2 = jax.random.split(key, 4)

    x = jax.random.normal(kx, (B, J, Fd, T), dtype=jnp.float32)
    timesteps = jnp.array([3, 7], dtype=jnp.int32)
    scale = jnp.array([2.5, 0.0], dtype=jnp.float32)           # y['scale']
    cond_emb = jax.random.normal(kc, (B, L), dtype=jnp.float32)

    params = {
        "w1": jax.random.normal(kw1, (D_in, L), dtype=jnp.float32) * 0.1,
        "b1": jnp.linspace(-0.1, 0.1, L, dtype=jnp.float32).reshape(1, L),
        "w2": jax.random.normal(kw2, (L, D_in), dtype=jnp.float32) * 0.1,
        "b2": jnp.linspace(0.05, -0.05, D_in, dtype=jnp.float32).reshape(1, D_in),
    }

    cfg = jax.jit(cfg_sample)
    out = jax.block_until_ready(cfg(x, timesteps, scale, cond_emb, params))
    assert out.shape == (B, J, Fd, T)

    # Tight oracle: identical math + identical MXU precision policy as the kernel.
    ref_tight = jax.block_until_ready(
        _reference(x, timesteps, scale, cond_emb, params, bf16_matmul=True, fold=True))
    assert jnp.allclose(out, ref_tight, rtol=2e-3, atol=2e-3), "mismatch vs tight reference"

    # Faithful oracle: literal two-call module forward in pure f32.  Tolerance
    # covers bf16 MXU-input quantization amplified by the guidance scale.
    ref_faithful = jax.block_until_ready(
        _reference(x, timesteps, scale, cond_emb, params, bf16_matmul=False, fold=False))
    assert jnp.allclose(out, ref_faithful, rtol=6e-2, atol=6e-2), "mismatch vs f32 reference"

    print("KERNEL_OK")
</pallas_src>

<mosaic_0001>
module attributes {stable_mosaic.version = 11 : i64} {
  func.func @_cfg_kernel(%arg0: i32, %arg1: i32, %arg2: memref<2xf32, #tpu.memory_space<smem>>, %arg3: memref<1x128x128xbf16, #tpu.memory_space<vmem>>, %arg4: memref<1x128x1xf32, #tpu.memory_space<vmem>>, %arg5: memref<1x128x1xf32, #tpu.memory_space<vmem>>, %arg6: memref<128x128xbf16, #tpu.memory_space<vmem>>, %arg7: memref<128x128xbf16, #tpu.memory_space<vmem>>, %arg8: memref<128x1xf32, #tpu.memory_space<vmem>>, %arg9: memref<1x128x128xf32, #tpu.memory_space<vmem>>) attributes {dimension_semantics = [#tpu.dimension_semantics<parallel>, #tpu.dimension_semantics<parallel>], iteration_bounds = array<i64: 2, 1>, scalar_prefetch = 1 : i64, scratch_operands = 0 : i64, tpu.core_type = #tpu.core_type<tc>, window_params = [{transform_indices = @transform_0, window_bounds = array<i64: 1, 128, 128>}, {transform_indices = @transform_1, window_bounds = array<i64: 1, 128, 1>}, {transform_indices = @transform_2, window_bounds = array<i64: 1, 128, 1>}, {pipeline_mode = #tpu.pipeline_mode<synchronous>, transform_indices = @transform_3, window_bounds = array<i64: 128, 128>}, {pipeline_mode = #tpu.pipeline_mode<synchronous>, transform_indices = @transform_4, window_bounds = array<i64: 128, 128>}, {pipeline_mode = #tpu.pipeline_mode<synchronous>, transform_indices = @transform_5, window_bounds = array<i64: 128, 1>}, {transform_indices = @transform_6, window_bounds = array<i64: 1, 128, 128>}]} {
    %c0 = arith.constant 0 : index
    %c0_0 = arith.constant 0 : index
    %c0_1 = arith.constant 0 : index
    %0 = vector.load %arg3[%c0, %c0_0, %c0_1] : memref<1x128x128xbf16, #tpu.memory_space<vmem>>, vector<1x128x128xbf16>
    %1 = vector.shape_cast %0 : vector<1x128x128xbf16> to vector<128x128xbf16>
    %c0_2 = arith.constant 0 : index
    %c0_3 = arith.constant 0 : index
    %2 = vector.load %arg6[%c0_2, %c0_3] : memref<128x128xbf16, #tpu.memory_space<vmem>>, vector<128x128xbf16>
    %cst = arith.constant dense<0.000000e+00> : vector<128x128xf32>
    %3 = tpu.matmul %2, %1, %cst {dimension_numbers = #tpu.dot_dimension_numbers<[1], [0], [0], [1], [0, 0, 1, 1], [], []>} : vector<128x128xbf16>, vector<128x128xbf16>, vector<128x128xf32> -> vector<128x128xf32>
    %c0_4 = arith.constant 0 : index
    %c0_5 = arith.constant 0 : index
    %c0_6 = arith.constant 0 : index
    %4 = vector.load %arg4[%c0_4, %c0_5, %c0_6] : memref<1x128x1xf32, #tpu.memory_space<vmem>>, vector<1x128x1xf32>
    %5 = vector.shape_cast %4 : vector<1x128x1xf32> to vector<128x1xf32>
    %6 = vector.broadcast %5 : vector<128x1xf32> to vector<128x128xf32>
    %7 = arith.addf %3, %6 : vector<128x128xf32>
    %8 = arith.mulf %7, %7 : vector<128x128xf32>
    %9 = arith.mulf %7, %8 : vector<128x128xf32>
    %cst_7 = arith.constant 4.471500e-02 : f32
    %10 = vector.broadcast %cst_7 : f32 to vector<128x128xf32>
    %11 = arith.mulf %10, %9 : vector<128x128xf32>
    %12 = arith.addf %7, %11 : vector<128x128xf32>
    %cst_8 = arith.constant 0.797884583 : f32
    %13 = vector.broadcast %cst_8 : f32 to vector<128x128xf32>
    %14 = arith.mulf %13, %12 : vector<128x128xf32>
    %15 = math.tanh %14 : vector<128x128xf32>
    %cst_9 = arith.constant 1.000000e+00 : f32
    %16 = vector.broadcast %cst_9 : f32 to vector<128x128xf32>
    %17 = arith.addf %16, %15 : vector<128x128xf32>
    %cst_10 = arith.constant 5.000000e-01 : f32
    %18 = vector.broadcast %cst_10 : f32 to vector<128x128xf32>
    %19 = arith.mulf %18, %17 : vector<128x128xf32>
    %20 = arith.mulf %7, %19 : vector<128x128xf32>
    %21 = arith.truncf %20 : vector<128x128xf32> to vector<128x128xbf16>
    %c0_11 = arith.constant 0 : index
    %c0_12 = arith.constant 0 : index
    %c0_13 = arith.constant 0 : index
    %22 = vector.load %arg5[%c0_11, %c0_12, %c0_13] : memref<1x128x1xf32, #tpu.memory_space<vmem>>, vector<1x128x1xf32>
    %23 = vector.shape_cast %22 : vector<1x128x1xf32> to vector<128x1xf32>
    %24 = vector.broadcast %23 : vector<128x1xf32> to vector<128x128xf32>
    %25 = arith.addf %3, %24 : vector<128x128xf32>
    %26 = arith.mulf %25, %25 : vector<128x128xf32>
    %27 = arith.mulf %25, %26 : vector<128x128xf32>
    %cst_14 = arith.constant 4.471500e-02 : f32
    %28 = vector.broadcast %cst_14 : f32 to vector<128x128xf32>
    %29 = arith.mulf %28, %27 : vector<128x128xf32>
    %30 = arith.addf %25, %29 : vector<128x128xf32>
    %cst_15 = arith.constant 0.797884583 : f32
    %31 = vector.broadcast %cst_15 : f32 to vector<128x128xf32>
    %32 = arith.mulf %31, %30 : vector<128x128xf32>
    %33 = math.tanh %32 : vector<128x128xf32>
    %cst_16 = arith.constant 1.000000e+00 : f32
    %34 = vector.broadcast %cst_16 : f32 to vector<128x128xf32>
    %35 = arith.addf %34, %33 : vector<128x128xf32>
    %cst_17 = arith.constant 5.000000e-01 : f32
    %36 = vector.broadcast %cst_17 : f32 to vector<128x128xf32>
    %37 = arith.mulf %36, %35 : vector<128x128xf32>
    %38 = arith.mulf %25, %37 : vector<128x128xf32>
    %39 = arith.truncf %38 : vector<128x128xf32> to vector<128x128xbf16>
    %40 = arith.index_cast %arg0 : i32 to index
    %41 = memref.load %arg2[%40] : memref<2xf32, #tpu.memory_space<smem>>
    %42 = arith.extf %21 : vector<128x128xbf16> to vector<128x128xf32>
    %43 = arith.extf %39 : vector<128x128xbf16> to vector<128x128xf32>
    %44 = arith.subf %43, %42 : vector<128x128xf32>
    %45 = vector.broadcast %41 : f32 to vector<128x128xf32>
    %46 = arith.mulf %45, %44 : vector<128x128xf32>
    %47 = arith.addf %42, %46 : vector<128x128xf32>
    %c0_18 = arith.constant 0 : index
    %c0_19 = arith.constant 0 : index
    %48 = vector.load %arg7[%c0_18, %c0_19] : memref<128x128xbf16, #tpu.memory_space<vmem>>, vector<128x128xbf16>
    %49 = arith.truncf %47 : vector<128x128xf32> to vector<128x128xbf16>
    %cst_20 = arith.constant dense<0.000000e+00> : vector<128x128xf32>
    %50 = tpu.matmul %48, %49, %cst_20 {dimension_numbers = #tpu.dot_dimension_numbers<[1], [0], [0], [1], [0, 0, 1, 1], [], []>} : vector<128x128xbf16>, vector<128x128xbf16>, vector<128x128xf32> -> vector<128x128xf32>
    %c0_21 = arith.constant 0 : index
    %c0_22 = arith.constant 0 : index
    %51 = vector.load %arg8[%c0_21, %c0_22] : memref<128x1xf32, #tpu.memory_space<vmem>>, vector<128x1xf32>
    %52 = vector.broadcast %51 : vector<128x1xf32> to vector<128x128xf32>
    %53 = arith.addf %50, %52 : vector<128x128xf32>
    %c0_23 = arith.constant 0 : index
    %c0_24 = arith.constant 0 : index
    %c0_25 = arith.constant 0 : index
    %54 = vector.load %arg9[%c0_23, %c0_24, %c0_25] : memref<1x128x128xf32, #tpu.memory_space<vmem>>, vector<1x128x128xf32>
    %55 = vector.shape_cast %54 : vector<1x128x128xf32> to vector<128x128xf32>
    %56 = vector.shape_cast %53 : vector<128x128xf32> to vector<1x128x128xf32>
    tpu.vector_store %arg9[%c0_23, %c0_24, %c0_25], %56 {strides = array<i32>} : memref<1x128x128xf32, #tpu.memory_space<vmem>>, vector<1x128x128xf32>,
    return
  }
  func.func @transform_0(%arg0: i32, %arg1: i32, %arg2: memref<2xf32, #tpu.memory_space<smem>>) -> (i32, i32, i32) {
    %c0_i32 = arith.constant 0 : i32
    %c0_i32_0 = arith.constant 0 : i32
    return %arg0, %c0_i32, %arg1 : i32, i32, i32
  }
  func.func @transform_1(%arg0: i32, %arg1: i32, %arg2: memref<2xf32, #tpu.memory_space<smem>>) -> (i32, i32, i32) {
    %c0_i32 = arith.constant 0 : i32
    %c0_i32_0 = arith.constant 0 : i32
    %c0_i32_1 = arith.constant 0 : i32
    return %arg0, %c0_i32, %c0_i32_0 : i32, i32, i32
  }
  func.func @transform_2(%arg0: i32, %arg1: i32, %arg2: memref<2xf32, #tpu.memory_space<smem>>) -> (i32, i32, i32) {
    %c0_i32 = arith.constant 0 : i32
    %c0_i32_0 = arith.constant 0 : i32
    %c0_i32_1 = arith.constant 0 : i32
    return %arg0, %c0_i32, %c0_i32_0 : i32, i32, i32
  }
  func.func @transform_3(%arg0: i32, %arg1: i32, %arg2: memref<2xf32, #tpu.memory_space<smem>>) -> (i32, i32) {
    %c0_i32 = arith.constant 0 : i32
    %c0_i32_0 = arith.constant 0 : i32
    %c0_i32_1 = arith.constant 0 : i32
    return %c0_i32, %c0_i32_0 : i32, i32
  }
  func.func @transform_4(%arg0: i32, %arg1: i32, %arg2: memref<2xf32, #tpu.memory_space<smem>>) -> (i32, i32) {
    %c0_i32 = arith.constant 0 : i32
    %c0_i32_0 = arith.constant 0 : i32
    %c0_i32_1 = arith.constant 0 : i32
    return %c0_i32, %c0_i32_0 : i32, i32
  }
  func.func @transform_5(%arg0: i32, %arg1: i32, %arg2: memref<2xf32, #tpu.memory_space<smem>>) -> (i32, i32) {
    %c0_i32 = arith.constant 0 : i32
    %c0_i32_0 = arith.constant 0 : i32
    %c0_i32_1 = arith.constant 0 : i32
    return %c0_i32, %c0_i32_0 : i32, i32
  }
  func.func @transform_6(%arg0: i32, %arg1: i32, %arg2: memref<2xf32, #tpu.memory_space<smem>>) -> (i32, i32, i32) {
    %c0_i32 = arith.constant 0 : i32
    %c0_i32_0 = arith.constant 0 : i32
    return %arg0, %c0_i32, %arg1 : i32, i32, i32
  }
}

</mosaic_0001>

<llo_original>
// kernel: cfg_sample.1
$region0: #{cfg_sample.1}
  #allocation0 [shape = 'u32[]', space=smem, size = 0x4, offset = 0x4, fixed_abs, tag = 'smem constant byte address 0x4 - core index']
  #allocation1 [shape = 'u32[144,128]{1,0:T(1,128)}', space=vmem, size = 0x12000, scoped, tag = 'internal scratch']
  #allocation2 [shape = 's32[1]{0}', space=sflag, size = 0x4, scoped, tag = 'scoped memory for cfg_sample.1']
  #allocation3 [shape = 'u8[512]{0}', space=smem, size = 0x200, scoped, tag = 'prefetched SMEM operand 0']
  %s0 = inlined_call_operand.vmem [shape: f32[2], index: 0, kind: input, shape index: {}]
  %s1 = inlined_call_operand.vmem [shape: bf16[2,128,128], index: 1, kind: input, shape index: {}]
  %s2 = inlined_call_operand.vmem [shape: f32[2,128,1], index: 2, kind: input, shape index: {}]
  %s3 = inlined_call_operand.vmem [shape: f32[2,128,1], index: 3, kind: input, shape index: {}]
  %s4 = inlined_call_operand.vmem [shape: bf16[128,128], index: 4, kind: input, shape index: {}]
  %s5 = inlined_call_operand.vmem [shape: bf16[128,128], index: 5, kind: input, shape index: {}]
  %s6 = inlined_call_operand.vmem [shape: f32[128,1], index: 6, kind: input, shape index: {}]
  %s7 = inlined_call_operand.vmem [shape: f32[2,128,128], index: 7, kind: output, shape index: {}]
  %s8 = sld [smem:[#allocation0]]
  $region57: #{cfg_sample.1} parent=0
    _
  %s10 = ssub.s32 1, %s8
  %s11 = scalar_select 0, %s10, %s8
  %s12 = sshll.u32 %s0, 4
  %s13 = int_to_ptr.vmem [resolvable:$true] %s12
  %15 = dma.vmem_to_smem %s13, 16, [#allocation3], [#allocation2]
  %16 = dma.done [#allocation2], 16
  %17 = sfence
  loop: start=0, step=1, limit=4
  $region2: #{cfg_sample.1} parent=0 // loop_pre_header
    _
  $region3: #{cfg_sample.1} parent=0 // loop_header
    %s19 = sphi 0, %s23
    %p20 = scmp.ge.s32.totalorder %s19, 4
    %s26 = sphi 0, %s38
    %s27 = sphi 0, %s34
    %s28 = sphi 0, %s26
    %s29 = sphi 0, %s27
    %s30 = sphi 0, %s28
    %s31 = sphi 0, %s29
    %s43 = sphi 0, %s45
    %s46 = sphi 0, %s43
    %s47 = sphi 0, %s46
    %s63 = sphi 0, %s47
    %s69 = sphi 0, %s71
    %s72 = sphi 0, %s69
    %s73 = sphi 0, %s72
    %s89 = sphi 0, %s73
    %s95 = sphi 0, %s97
    %s98 = sphi 0, %s95
    %s99 = sphi 0, %s98
    %s115 = sphi 0, %s99
    %s119 = sphi 0, %s119
    %s121 = sphi 0, %s119
    %s122 = sphi 0, %s121
    %s136 = sphi 0, %s122
    %s140 = sphi 0, %s140
    %s142 = sphi 0, %s140
    %s143 = sphi 0, %s142
    %s157 = sphi 0, %s143
    %s161 = sphi 0, %s161
    %s163 = sphi 0, %s161
    %s164 = sphi 0, %s163
    %s178 = sphi 0, %s164
    %s186 = sphi 0, %s188
    %s189 = sphi 0, %s186
    %s190 = sphi 0, %s189
    %s206 = sphi 0, %s190
  $region4: #{cfg_sample.1} parent=0 // loop_header_branch
    %22 = sbr.rel (%p20) target = $region8
  $region5: #{cfg_sample.1} parent=0 // loop_body
    %s24 = ssub.s32 %s19, 1
    %s25 = ssub.s32 %s19, 2
    %s32 = sadd.s32 1, %s27
    %p33 = scmp.ge.s32.totalorder %s32, 1
    %s34 = scalar_select %p33, 0, %s32
    %s35 = sadd.s32 1, %s26
    %s36 = scalar_select %p33, %s35, %s26
    %p37 = scmp.ge.s32.totalorder %s36, 2
    %s38 = scalar_select %p37, 0, %s36
    %s39 = ssub.s32 %s26, %s38
    %s40 = ssub.s32 %s27, %s34
    %s41 = sor.u32 %s39, %s40
    %p42 = scmp.eq.s32.totalorder %s41, 0
    %s44 = sadd.s32 %s43, 1
    %s45 = scalar_select %p42, %s43, %s44
    %p48 = pneg %p42
    %p49 = scmp.eq.s32.totalorder %s19, 1
    %p50 = por %p48, %p49
    %p51 = scmp.ne.s32.totalorder %s43, %s46
    %p52 = scmp.eq.s32.totalorder %s19, 0
    %p53 = por %p51, %p52
    %p54 = scmp.ne.s32.totalorder %s43, %s46
    %p55 = scmp.eq.s32.totalorder %s24, 1
    %p56 = por %p54, %p55
    %p57 = scmp.ne.s32.totalorder %s46, %s47
    %p58 = scmp.eq.s32.totalorder %s24, 0
    %p59 = por %p57, %p58
    %p60 = scmp.ne.s32.totalorder %s46, %s47
    %p61 = scmp.eq.s32.totalorder %s25, 1
    %p62 = por %p60, %p61
    %p64 = scmp.ne.s32.totalorder %s47, %s63
    %p65 = scmp.eq.s32.totalorder %s25, 0
    %p66 = por %p64, %p65
    %s67 = ssub.s32 %s26, %s38
    %p68 = scmp.eq.s32.totalorder %s67, 0
    %s70 = sadd.s32 %s69, 1
    %s71 = scalar_select %p68, %s69, %s70
    %p74 = pneg %p68
    %p75 = scmp.eq.s32.totalorder %s19, 1
    %p76 = por %p74, %p75
    %p77 = scmp.ne.s32.totalorder %s69, %s72
    %p78 = scmp.eq.s32.totalorder %s19, 0
    %p79 = por %p77, %p78
    %p80 = scmp.ne.s32.totalorder %s69, %s72
    %p81 = scmp.eq.s32.totalorder %s24, 1
    %p82 = por %p80, %p81
    %p83 = scmp.ne.s32.totalorder %s72, %s73
    %p84 = scmp.eq.s32.totalorder %s24, 0
    %p85 = por %p83, %p84
    %p86 = scmp.ne.s32.totalorder %s72, %s73
    %p87 = scmp.eq.s32.totalorder %s25, 1
    %p88 = por %p86, %p87
    %p90 = scmp.ne.s32.totalorder %s73, %s89
    %p91 = scmp.eq.s32.totalorder %s25, 0
    %p92 = por %p90, %p91
    %s93 = ssub.s32 %s26, %s38
    %p94 = scmp.eq.s32.totalorder %s93, 0
    %s96 = sadd.s32 %s95, 1
    %s97 = scalar_select %p94, %s95, %s96
    %p100 = pneg %p94
    %p101 = scmp.eq.s32.totalorder %s19, 1
    %p102 = por %p100, %p101
    %p103 = scmp.ne.s32.totalorder %s95, %s98
    %p104 = scmp.eq.s32.totalorder %s19, 0
    %p105 = por %p103, %p104
    %p106 = scmp.ne.s32.totalorder %s95, %s98
    %p107 = scmp.eq.s32.totalorder %s24, 1
    %p108 = por %p106, %p107
    %p109 = scmp.ne.s32.totalorder %s98, %s99
    %p110 = scmp.eq.s32.totalorder %s24, 0
    %p111 = por %p109, %p110
    %p112 = scmp.ne.s32.totalorder %s98, %s99
    %p113 = scmp.eq.s32.totalorder %s25, 1
    %p114 = por %p112, %p113
    %p116 = scmp.ne.s32.totalorder %s99, %s115
    %p117 = scmp.eq.s32.totalorder %s25, 0
    %p118 = por %p116, %p117
    %s120 = sadd.s32 %s119, 1
    %p123 = scmp.eq.s32.totalorder %s19, 1
    %p124 = scmp.ne.s32.totalorder %s119, %s121
    %p125 = scmp.eq.s32.totalorder %s19, 0
    %p126 = por %p124, %p125
    %p127 = scmp.ne.s32.totalorder %s119, %s121
    %p128 = scmp.eq.s32.totalorder %s24, 1
    %p129 = por %p127, %p128
    %p130 = scmp.ne.s32.totalorder %s121, %s122
    %p131 = scmp.eq.s32.totalorder %s24, 0
    %p132 = por %p130, %p131
    %p133 = scmp.ne.s32.totalorder %s121, %s122
    %p134 = scmp.eq.s32.totalorder %s25, 1
    %p135 = por %p133, %p134
    %p137 = scmp.ne.s32.totalorder %s122, %s136
    %p138 = scmp.eq.s32.totalorder %s25, 0
    %p139 = por %p137, %p138
    %s141 = sadd.s32 %s140, 1
    %p144 = scmp.eq.s32.totalorder %s19, 1
    %p145 = scmp.ne.s32.totalorder %s140, %s142
    %p146 = scmp.eq.s32.totalorder %s19, 0
    %p147 = por %p145, %p146
    %p148 = scmp.ne.s32.totalorder %s140, %s142
    %p149 = scmp.eq.s32.totalorder %s24, 1
    %p150 = por %p148, %p149
    %p151 = scmp.ne.s32.totalorder %s142, %s143
    %p152 = scmp.eq.s32.totalorder %s24, 0
    %p153 = por %p151, %p152
    %p154 = scmp.ne.s32.totalorder %s142, %s143
    %p155 = scmp.eq.s32.totalorder %s25, 1
    %p156 = por %p154, %p155
    %p158 = scmp.ne.s32.totalorder %s143, %s157
    %p159 = scmp.eq.s32.totalorder %s25, 0
    %p160 = por %p158, %p159
    %s162 = sadd.s32 %s161, 1
    %p165 = scmp.eq.s32.totalorder %s19, 1
    %p166 = scmp.ne.s32.totalorder %s161, %s163
    %p167 = scmp.eq.s32.totalorder %s19, 0
    %p168 = por %p166, %p167
    %p169 = scmp.ne.s32.totalorder %s161, %s163
    %p170 = scmp.eq.s32.totalorder %s24, 1
    %p171 = por %p169, %p170
    %p172 = scmp.ne.s32.totalorder %s163, %s164
    %p173 = scmp.eq.s32.totalorder %s24, 0
    %p174 = por %p172, %p173
    %p175 = scmp.ne.s32.totalorder %s163, %s164
    %p176 = scmp.eq.s32.totalorder %s25, 1
    %p177 = por %p175, %p176
    %p179 = scmp.ne.s32.totalorder %s164, %s178
    %p180 = scmp.eq.s32.totalorder %s25, 0
    %p181 = por %p179, %p180
    %s182 = ssub.s32 %s26, %s38
    %s183 = ssub.s32 %s27, %s34
    %s184 = sor.u32 %s182, %s183
    %p185 = scmp.eq.s32.totalorder %s184, 0
    %s187 = sadd.s32 %s186, 1
    %s188 = scalar_select %p185, %s186, %s187
    %p191 = pneg %p185
    %p192 = scmp.eq.s32.totalorder %s19, 1
    %p193 = por %p191, %p192
    %p194 = scmp.ne.s32.totalorder %s186, %s189
    %p195 = scmp.eq.s32.totalorder %s19, 0
    %p196 = por %p194, %p195
    %p197 = scmp.ne.s32.totalorder %s186, %s189
    %p198 = scmp.eq.s32.totalorder %s24, 1
    %p199 = por %p197, %p198
    %p200 = scmp.ne.s32.totalorder %s189, %s190
    %p201 = scmp.eq.s32.totalorder %s24, 0
    %p202 = por %p200, %p201
    %p203 = scmp.ne.s32.totalorder %s189, %s190
    %p204 = scmp.eq.s32.totalorder %s25, 1
    %p205 = por %p203, %p204
    %p207 = scmp.ne.s32.totalorder %s190, %s206
    %p208 = scmp.eq.s32.totalorder %s25, 0
    %p209 = por %p207, %p208
    %p210 = scmp.le.s32.totalorder 1, %s19
    %p211 = scmp.lt.s32.totalorder %s19, 3
    %p212 = pnand %p210, %p211
    %p213 = pneg %p212
    // Predicated region
    $region9: #{cfg_sample.1} parent=5 // pred_check
      _
    $region10: #{cfg_sample.1} parent=5 // pred_check_branch
      %215 = sbr.rel (%p212) target = $region12
    $region11: #{cfg_sample.1} parent=5 // pred_region
      %s216 = ssub.s32 %s19, 1
      // Predicated region
      $region13: #{cfg_sample.1} parent=11 // pred_check
        %p217 = pneg %p132
      $region14: #{cfg_sample.1} parent=11 // pred_check_branch
        %219 = sbr.rel (%p217) target = $region16
      $region15: #{cfg_sample.1} parent=11 // pred_region
        _
      $region16: #{cfg_sample.1} parent=11 // pred_fallthru
        _
      // Predicated region
      $region17: #{cfg_sample.1} parent=11 // pred_check
        %p220 = pneg %p153
      $region18: #{cfg_sample.1} parent=11 // pred_check_branch
        %222 = sbr.rel (%p220) target = $region20
      $region19: #{cfg_sample.1} parent=11 // pred_region
        _
      $region20: #{cfg_sample.1} parent=11 // pred_fallthru
        _
      // Predicated region
      $region21: #{cfg_sample.1} parent=11 // pred_check
        %p223 = pneg %p174
      $region22: #{cfg_sample.1} parent=11 // pred_check_branch
        %225 = sbr.rel (%p223) target = $region24
      $region23: #{cfg_sample.1} parent=11 // pred_region
        _
      $region24: #{cfg_sample.1} parent=11 // pred_fallthru
        _
    $region12: #{cfg_sample.1} parent=5 // pred_fallthru
      _
    %p226 = scmp.lt.s32.totalorder %s19, 2
    // Predicated region
    $region25: #{cfg_sample.1} parent=5 // pred_check
      %p227 = pneg %p226
    $region26: #{cfg_sample.1} parent=5 // pred_check_branch
      %229 = sbr.rel (%p227) target = $region28
    $region27: #{cfg_sample.1} parent=5 // pred_region
      // Predicated region
      $region29: #{cfg_sample.1} parent=27 // pred_check
        %p230 = pneg %p53
      $region30: #{cfg_sample.1} parent=27 // pred_check_branch
        %232 = sbr.rel (%p230) target = $region32
      $region31: #{cfg_sample.1} parent=27 // pred_region
        %p233 = scmp.lt.s32.totalorder %s26, 1
        %s234 = scalar_select %p233, %s26, 1
        %p235 = scmp.lt.s32.totalorder %s27, 0
        %s236 = scalar_select %p235, %s27, 0
        %s237 = smul.addr %s234, 16
        %s238 = sadd.s32 %s236, %s237
        %s239 = smul.addr %s238, 4
        %s240 = scalar_lea.vmem %s1, %s239
      $region32: #{cfg_sample.1} parent=27 // pred_fallthru
        _
      // Predicated region
      $region33: #{cfg_sample.1} parent=27 // pred_check
        %p241 = pneg %p79
      $region34: #{cfg_sample.1} parent=27 // pred_check_branch
        %243 = sbr.rel (%p241) target = $region36
      $region35: #{cfg_sample.1} parent=27 // pred_region
        %p244 = scmp.lt.s32.totalorder %s26, 1
        %s245 = scalar_select %p244, %s26, 1
        %s246 = smul.addr %s245, 16
        %s247 = smul.addr %s246, 8
        %s248 = scalar_lea.vmem %s2, %s247
      $region36: #{cfg_sample.1} parent=27 // pred_fallthru
        _
      // Predicated region
      $region37: #{cfg_sample.1} parent=27 // pred_check
        %p249 = pneg %p105
      $region38: #{cfg_sample.1} parent=27 // pred_check_branch
        %251 = sbr.rel (%p249) target = $region40
      $region39: #{cfg_sample.1} parent=27 // pred_region
        %p252 = scmp.lt.s32.totalorder %s26, 1
        %s253 = scalar_select %p252, %s26, 1
        %s254 = smul.addr %s253, 16
        %s255 = smul.addr %s254, 8
        %s256 = scalar_lea.vmem %s3, %s255
      $region40: #{cfg_sample.1} parent=27 // pred_fallthru
        _
    $region28: #{cfg_sample.1} parent=5 // pred_fallthru
      _
    %p257 = scmp.le.s32.totalorder 1, %s19
    %p258 = scmp.lt.s32.totalorder %s19, 3
    %p259 = pnand %p257, %p258
    %p260 = pneg %p259
    // Predicated region
    $region41: #{cfg_sample.1} parent=5 // pred_check
      _
    $region42: #{cfg_sample.1} parent=5 // pred_check_branch
      %262 = sbr.rel (%p259) target = $region44
    $region43: #{cfg_sample.1} parent=5 // pred_region
      %s263 = ssub.s32 %s19, 1
      %p264 = scmp.lt.s32.totalorder %s28, 1
      %s265 = scalar_select %p264, %s28, 1
      %p266 = scmp.lt.s32.totalorder %s29, 0
      %s267 = scalar_select %p266, %s29, 0
      %s268 = smul.addr %s265, 16
      %s269 = sadd.s32 %s267, %s268
      %s270 = smul.addr %s269, 4
      %s271 = scalar_lea.vmem %s1, %s270
      %p272 = pneg %p59
      %p273 = pneg %p56
      %p274 = scmp.lt.s32.totalorder %s28, 1
      %s275 = scalar_select %p274, %s28, 1
      %s276 = smul.addr %s275, 16
      %s277 = smul.addr %s276, 8
      %s278 = scalar_lea.vmem %s2, %s277
      %p279 = pneg %p85
      %p280 = pneg %p82
      %p281 = scmp.lt.s32.totalorder %s28, 1
      %s282 = scalar_select %p281, %s28, 1
      %s283 = smul.addr %s282, 16
      %s284 = smul.addr %s283, 8
      %s285 = scalar_lea.vmem %s3, %s284
      %p286 = pneg %p111
      %p287 = pneg %p108
      %p288 = pneg %p132
      %p289 = pneg %p129
      %p290 = pneg %p153
      %p291 = pneg %p150
      %p292 = pneg %p174
      %p293 = pneg %p171
      %p294 = pneg %p202
      %p295 = pneg %p199
      %p296 = scmp.lt.s32.totalorder %s28, 1
      %s297 = scalar_select %p296, %s28, 1
      %p298 = scmp.lt.s32.totalorder %s29, 0
      %s299 = scalar_select %p298, %s29, 0
      %s300 = smul.addr %s297, 16
      %s301 = sadd.s32 %s299, %s300
      %s302 = smul.addr %s301, 8
      %s303 = scalar_lea.vmem %s7, %s302
      %p304 = scmp.lt.s32.totalorder %s28, 1
      %s305 = scalar_select %p304, %s28, 1
      %p306 = scmp.lt.s32.totalorder %s29, 0
      %s307 = scalar_select %p306, %s29, 0
      %s308 = smul.addr %s305, 16
      %s309 = sadd.s32 %s307, %s308
      %s310 = smul.addr %s309, 4
      %s311 = scalar_lea.vmem %s1, %s310
      %p312 = scmp.lt.s32.totalorder %s28, 1
      %s313 = scalar_select %p312, %s28, 1
      %s314 = smul.addr %s313, 16
      %s315 = smul.addr %s314, 8
      %s316 = scalar_lea.vmem %s2, %s315
      %p317 = scmp.lt.s32.totalorder %s28, 1
      %s318 = scalar_select %p317, %s28, 1
      %s319 = smul.addr %s318, 16
      %s320 = smul.addr %s319, 8
      %s321 = scalar_lea.vmem %s3, %s320
      %p322 = scmp.lt.s32.totalorder %s28, 1
      %s323 = scalar_select %p322, %s28, 1
      %p324 = scmp.lt.s32.totalorder %s29, 0
      %s325 = scalar_select %p324, %s29, 0
      %s326 = smul.addr %s323, 16
      %s327 = sadd.s32 %s325, %s326
      %s328 = smul.addr %s327, 8
      %s329 = scalar_lea.vmem %s7, %s328
      %v331 = vld [vmem:[%s311] sm:$0xf]
      %v332 = vld [vmem:[%s311 + $0x4] sm:$0xf]
      %v333 = vld [vmem:[%s311 + $0x8] sm:$0xf]
      %v334 = vld [vmem:[%s311 + $0xc] sm:$0xf]
      %v335 = vld [vmem:[%s311 + $0x10] sm:$0xf]
      %v336 = vld [vmem:[%s311 + $0x14] sm:$0xf]
      %v337 = vld [vmem:[%s311 + $0x18] sm:$0xf]
      %v338 = vld [vmem:[%s311 + $0x1c] sm:$0xf]
      %v339 = vld [vmem:[%s311 + $0x20] sm:$0xf]
      %v340 = vld [vmem:[%s311 + $0x24] sm:$0xf]
      %v341 = vld [vmem:[%s311 + $0x28] sm:$0xf]
      %v342 = vld [vmem:[%s311 + $0x2c] sm:$0xf]
      %v343 = vld [vmem:[%s311 + $0x30] sm:$0xf]
      %v344 = vld [vmem:[%s311 + $0x34] sm:$0xf]
      %v345 = vld [vmem:[%s311 + $0x38] sm:$0xf]
      %v346 = vld [vmem:[%s311 + $0x3c] sm:$0xf]
      %v347 = vld [vmem:[%s4] sm:$0xf]
      %v348 = vld [vmem:[%s4 + $0x4] sm:$0xf]
      %v349 = vld [vmem:[%s4 + $0x8] sm:$0xf]
      %v350 = vld [vmem:[%s4 + $0xc] sm:$0xf]
      %v351 = vld [vmem:[%s4 + $0x10] sm:$0xf]
      %v352 = vld [vmem:[%s4 + $0x14] sm:$0xf]
      %v353 = vld [vmem:[%s4 + $0x18] sm:$0xf]
      %v354 = vld [vmem:[%s4 + $0x1c] sm:$0xf]
      %v355 = vld [vmem:[%s4 + $0x20] sm:$0xf]
      %v356 = vld [vmem:[%s4 + $0x24] sm:$0xf]
      %v357 = vld [vmem:[%s4 + $0x28] sm:$0xf]
      %v358 = vld [vmem:[%s4 + $0x2c] sm:$0xf]
      %v359 = vld [vmem:[%s4 + $0x30] sm:$0xf]
      %v360 = vld [vmem:[%s4 + $0x34] sm:$0xf]
      %v361 = vld [vmem:[%s4 + $0x38] sm:$0xf]
      %v362 = vld [vmem:[%s4 + $0x3c] sm:$0xf]
      %v379 = vunpack.c.l.b16 %v347
      %v380 = vunpack.c.l.b16 %v348
      %v381 = vunpack.c.l.b16 %v349
      %v382 = vunpack.c.l.b16 %v350
      %v383 = vunpack.c.l.b16 %v351
      %v384 = vunpack.c.l.b16 %v352
      %v385 = vunpack.c.l.b16 %v353
      %v386 = vunpack.c.l.b16 %v354
      %v387 = vunpack.c.l.b16 %v355
      %v388 = vunpack.c.l.b16 %v356
      %v389 = vunpack.c.l.b16 %v357
      %v390 = vunpack.c.l.b16 %v358
      %v391 = vunpack.c.l.b16 %v359
      %v392 = vunpack.c.l.b16 %v360
      %v393 = vunpack.c.l.b16 %v361
      %v394 = vunpack.c.l.b16 %v362
      %v395 = vpack.c.b16 %v380, %v379
      %v396 = vpack.c.b16 %v382, %v381
      %v397 = vpack.c.b16 %v384, %v383
      %v398 = vpack.c.b16 %v386, %v385
      %v399 = vpack.c.b16 %v388, %v387
      %v400 = vpack.c.b16 %v390, %v389
      %v401 = vpack.c.b16 %v392, %v391
      %v402 = vpack.c.b16 %v394, %v393
      %v427 = vunpack.c.l.b16 %v331
      %v428 = vunpack.c.l.b16 %v332
      %v429 = vunpack.c.l.b16 %v333
      %v430 = vunpack.c.l.b16 %v334
      %v431 = vunpack.c.l.b16 %v335
      %v432 = vunpack.c.l.b16 %v336
      %v433 = vunpack.c.l.b16 %v337
      %v434 = vunpack.c.l.b16 %v338
      %v435 = vunpack.c.l.b16 %v339
      %v436 = vunpack.c.l.b16 %v340
      %v437 = vunpack.c.l.b16 %v341
      %v438 = vunpack.c.l.b16 %v342
      %v439 = vunpack.c.l.b16 %v343
      %v440 = vunpack.c.l.b16 %v344
      %v441 = vunpack.c.l.b16 %v345
      %v442 = vunpack.c.l.b16 %v346
      %v443 = vpack.c.b16 %v428, %v427
      %v444 = vpack.c.b16 %v430, %v429
      %v445 = vpack.c.b16 %v432, %v431
      %v446 = vpack.c.b16 %v434, %v433
      %v447 = vpack.c.b16 %v436, %v435
      %v448 = vpack.c.b16 %v438, %v437
      %v449 = vpack.c.b16 %v440, %v439
      %v450 = vpack.c.b16 %v442, %v441
      %459 = vmatprep.subr.bf16.mxu0 0
      %460 = vmatpush1.bf16.msra.mxu0 %v443
      %461 = vmatprep.subr.bf16.mxu0 0
      %462 = vmatpush1.bf16.msra.mxu0 %v444
      %463 = vmatprep.subr.bf16.mxu0 0
      %464 = vmatpush1.bf16.msra.mxu0 %v445
      %465 = vmatprep.subr.bf16.mxu0 0
      %466 = vmatpush1.bf16.msra.mxu0 %v446
      %467 = vmatprep.subr.bf16.mxu0 0
      %468 = vmatpush1.bf16.msra.mxu0 %v447
      %469 = vmatprep.subr.bf16.mxu0 0
      %470 = vmatpush1.bf16.msra.mxu0 %v448
      %471 = vmatprep.subr.bf16.mxu0 0
      %472 = vmatpush1.bf16.msra.mxu0 %v449
      %473 = vmatprep.subr.bf16.mxu0 0
      %474 = vmatpush1.bf16.msra.mxu0 %v450
      %475 = vmatprep.subr.bf16.mxu0 0
      %476 = vmatpush1.bf16.msra.mxu0 0
      %477 = vmatprep.subr.bf16.mxu0 0
      %478 = vmatpush1.bf16.msra.mxu0 0
      %479 = vmatprep.subr.bf16.mxu0 0
      %480 = vmatpush1.bf16.msra.mxu0 0
      %481 = vmatprep.subr.bf16.mxu0 0
      %482 = vmatpush1.bf16.msra.mxu0 0
      %483 = vmatprep.subr.bf16.mxu0 0
      %484 = vmatpush1.bf16.msra.mxu0 0
      %485 = vmatprep.subr.bf16.mxu0 0
      %486 = vmatpush1.bf16.msra.mxu0 0
      %487 = vmatprep.subr.bf16.mxu0 0
      %488 = vmatpush1.bf16.msra.mxu0 0
      %489 = vmatprep.subr.bf16.mxu0 0
      %490 = vmatpush1.bf16.msra.mxu0 0
      %491 = vmatprep.mubr.bf16.mxu0 0
      %492 = vmatmul.mubr.bf16.gmra.mrb[0].mxu0 %v395
      %v493 = vpop.f32.mrb[0].mxu0
      %v494 = vadd.f32 0.0, %v493
      %v495 = vpop.f32.mrb[0].mxu0
      %v496 = vpop.f32.mrb[0].mxu0
      %v497 = vadd.f32 0.0, %v496
      %v498 = vpop.f32.mrb[0].mxu0
      %499 = vmatprep.mubr.bf16.mxu0 0
      %500 = vmatmul.mubr.bf16.gmra.mrb[0].mxu0 %v396
      %v501 = vpop.f32.mrb[0].mxu0
      %v502 = vadd.f32 0.0, %v501
      %v503 = vpop.f32.mrb[0].mxu0
      %v504 = vpop.f32.mrb[0].mxu0
      %v505 = vadd.f32 0.0, %v504
      %v506 = vpop.f32.mrb[0].mxu0
      %507 = vmatprep.mubr.bf16.mxu0 0
      %508 = vmatmul.mubr.bf16.gmra.mrb[0].mxu0 %v397
      %v509 = vpop.f32.mrb[0].mxu0
      %v510 = vadd.f32 0.0, %v509
      %v511 = vpop.f32.mrb[0].mxu0
      %v512 = vpop.f32.mrb[0].mxu0
      %v513 = vadd.f32 0.0, %v512
      %v514 = vpop.f32.mrb[0].mxu0
      %515 = vmatprep.mubr.bf16.mxu0 0
      %516 = vmatmul.mubr.bf16.gmra.mrb[0].mxu0 %v398
      %v517 = vpop.f32.mrb[0].mxu0
      %v518 = vadd.f32 0.0, %v517
      %v519 = vpop.f32.mrb[0].mxu0
      %v520 = vpop.f32.mrb[0].mxu0
      %v521 = vadd.f32 0.0, %v520
      %v522 = vpop.f32.mrb[0].mxu0
      %523 = vmatprep.mubr.bf16.mxu0 0
      %524 = vmatmul.mubr.bf16.gmra.mrb[0].mxu0 %v399
      %v525 = vpop.f32.mrb[0].mxu0
      %v526 = vadd.f32 0.0, %v525
      %v527 = vpop.f32.mrb[0].mxu0
      %v528 = vpop.f32.mrb[0].mxu0
      %v529 = vadd.f32 0.0, %v528
      %v530 = vpop.f32.mrb[0].mxu0
      %531 = vmatprep.mubr.bf16.mxu0 0
      %532 = vmatmul.mubr.bf16.gmra.mrb[0].mxu0 %v400
      %v533 = vpop.f32.mrb[0].mxu0
      %v534 = vadd.f32 0.0, %v533
      %v535 = vpop.f32.mrb[0].mxu0
      %v536 = vpop.f32.mrb[0].mxu0
      %v537 = vadd.f32 0.0, %v536
      %v538 = vpop.f32.mrb[0].mxu0
      %539 = vmatprep.mubr.bf16.mxu0 0
      %540 = vmatmul.mubr.bf16.gmra.mrb[0].mxu0 %v401
      %v541 = vpop.f32.mrb[0].mxu0
      %v542 = vadd.f32 0.0, %v541
      %v543 = vpop.f32.mrb[0].mxu0
      %v544 = vpop.f32.mrb[0].mxu0
      %v545 = vadd.f32 0.0, %v544
      %v546 = vpop.f32.mrb[0].mxu0
      %547 = vmatprep.mubr.bf16.mxu0 0
      %548 = vmatmul.mubr.bf16.gmra.mrb[0].mxu0 %v402
      %v549 = vpop.f32.mrb[0].mxu0
      %v550 = vadd.f32 0.0, %v549
      %v551 = vpop.f32.mrb[0].mxu0
      %v552 = vpop.f32.mrb[0].mxu0
      %v553 = vadd.f32 0.0, %v552
      %v554 = vpop.f32.mrb[0].mxu0
      %555 = vdwg.mxu0
      %v556 = vld [vmem:[%s316] sm:$0xff]
      %v557 = vld [vmem:[%s316 + $0x8] sm:$0xff]
      %v558 = vld [vmem:[%s316 + $0x10] sm:$0xff]
      %v559 = vld [vmem:[%s316 + $0x18] sm:$0xff]
      %v560 = vld [vmem:[%s316 + $0x20] sm:$0xff]
      %v561 = vld [vmem:[%s316 + $0x28] sm:$0xff]
      %v562 = vld [vmem:[%s316 + $0x30] sm:$0xff]
      %v563 = vld [vmem:[%s316 + $0x38] sm:$0xff]
      %v564 = vld [vmem:[%s316 + $0x40] sm:$0xff]
      %v565 = vld [vmem:[%s316 + $0x48] sm:$0xff]
      %v566 = vld [vmem:[%s316 + $0x50] sm:$0xff]
      %v567 = vld [vmem:[%s316 + $0x58] sm:$0xff]
      %v568 = vld [vmem:[%s316 + $0x60] sm:$0xff]
      %v569 = vld [vmem:[%s316 + $0x68] sm:$0xff]
      %v570 = vld [vmem:[%s316 + $0x70] sm:$0xff]
      %v571 = vld [vmem:[%s316 + $0x78] sm:$0xff]
      %573 = vset.pattern.permute.xlu0 0
      %574 = vperm.xlu0 %573, %v556
      %v575 = vpop.permute.xlu0 %574
      %578 = vset.pattern.permute.xlu0 0
      %579 = vperm.xlu0 %578, %v557
      %v580 = vpop.permute.xlu0 %579
      %583 = vset.pattern.permute.xlu0 0
      %584 = vperm.xlu0 %583, %v558
      %v585 = vpop.permute.xlu0 %584
      %588 = vset.pattern.permute.xlu0 0
      %589 = vperm.xlu0 %588, %v559
      %v590 = vpop.permute.xlu0 %589
      %593 = vset.pattern.permute.xlu0 0
      %594 = vperm.xlu0 %593, %v560
      %v595 = vpop.permute.xlu0 %594
      %598 = vset.pattern.permute.xlu0 0
      %599 = vperm.xlu0 %598, %v561
      %v600 = vpop.permute.xlu0 %599
      %603 = vset.pattern.permute.xlu0 0
      %604 = vperm.xlu0 %603, %v562
      %v605 = vpop.permute.xlu0 %604
      %608 = vset.pattern.permute.xlu0 0
      %609 = vperm.xlu0 %608, %v563
      %v610 = vpop.permute.xlu0 %609
      %613 = vset.pattern.permute.xlu0 0
      %614 = vperm.xlu0 %613, %v564
      %v615 = vpop.permute.xlu0 %614
      %618 = vset.pattern.permute.xlu0 0
      %619 = vperm.xlu0 %618, %v565
      %v620 = vpop.permute.xlu0 %619
      %623 = vset.pattern.permute.xlu0 0
      %624 = vperm.xlu0 %623, %v566
      %v625 = vpop.permute.xlu0 %624
      %628 = vset.pattern.permute.xlu0 0
      %629 = vperm.xlu0 %628, %v567
      %v630 = vpop.permute.xlu0 %629
      %633 = vset.pattern.permute.xlu0 0
      %634 = vperm.xlu0 %633, %v568
      %v635 = vpop.permute.xlu0 %634
      %638 = vset.pattern.permute.xlu0 0
      %639 = vperm.xlu0 %638, %v569
      %v640 = vpop.permute.xlu0 %639
      %643 = vset.pattern.permute.xlu0 0
      %644 = vperm.xlu0 %643, %v570
      %v645 = vpop.permute.xlu0 %644
      %648 = vset.pattern.permute.xlu0 0
      %649 = vperm.xlu0 %648, %v571
      %v650 = vpop.permute.xlu0 %649
      %v652 = vadd.f32 %v494, %v575
      %v653 = vadd.f32 %v497, %v580
      %v654 = vadd.f32 %v502, %v585
      %v655 = vadd.f32 %v505, %v590
      %v656 = vadd.f32 %v510, %v595
      %v657 = vadd.f32 %v513, %v600
      %v658 = vadd.f32 %v518, %v605
      %v659 = vadd.f32 %v521, %v610
      %v660 = vadd.f32 %v526, %v615
      %v661 = vadd.f32 %v529, %v620
      %v662 = vadd.f32 %v534, %v625
      %v663 = vadd.f32 %v537, %v630
      %v664 = vadd.f32 %v542, %v635
      %v665 = vadd.f32 %v545, %v640
      %v666 = vadd.f32 %v550, %v645
      %v667 = vadd.f32 %v553, %v650
      %v668 = vmul.f32 %v652, %v652
      %v669 = vmul.f32 %v653, %v653
      %v670 = vmul.f32 %v654, %v654
      %v671 = vmul.f32 %v655, %v655
      %v672 = vmul.f32 %v656, %v656
      %v673 = vmul.f32 %v657, %v657
      %v674 = vmul.f32 %v658, %v658
      %v675 = vmul.f32 %v659, %v659
      %v676 = vmul.f32 %v660, %v660
      %v677 = vmul.f32 %v661, %v661
      %v678 = vmul.f32 %v662, %v662
      %v679 = vmul.f32 %v663, %v663
      %v680 = vmul.f32 %v664, %v664
      %v681 = vmul.f32 %v665, %v665
      %v682 = vmul.f32 %v666, %v666
      %v683 = vmul.f32 %v667, %v667
      %v684 = vmul.f32 %v652, %v668
      %v685 = vmul.f32 %v653, %v669
      %v686 = vmul.f32 %v654, %v670
      %v687 = vmul.f32 %v655, %v671
      %v688 = vmul.f32 %v656, %v672
      %v689 = vmul.f32 %v657, %v673
      %v690 = vmul.f32 %v658, %v674
      %v691 = vmul.f32 %v659, %v675
      %v692 = vmul.f32 %v660, %v676
      %v693 = vmul.f32 %v661, %v677
      %v694 = vmul.f32 %v662, %v678
      %v695 = vmul.f32 %v663, %v679
      %v696 = vmul.f32 %v664, %v680
      %v697 = vmul.f32 %v665, %v681
      %v698 = vmul.f32 %v666, %v682
      %v699 = vmul.f32 %v667, %v683
      %v700 = vmul.f32 %v684, 0.044715
      %v701 = vmul.f32 %v685, 0.044715
      %v702 = vmul.f32 %v686, 0.044715
      %v703 = vmul.f32 %v687, 0.044715
      %v704 = vmul.f32 %v688, 0.044715
      %v705 = vmul.f32 %v689, 0.044715
      %v706 = vmul.f32 %v690, 0.044715
      %v707 = vmul.f32 %v691, 0.044715
      %v708 = vmul.f32 %v692, 0.044715
      %v709 = vmul.f32 %v693, 0.044715
      %v710 = vmul.f32 %v694, 0.044715
      %v711 = vmul.f32 %v695, 0.044715
      %v712 = vmul.f32 %v696, 0.044715
      %v713 = vmul.f32 %v697, 0.044715
      %v714 = vmul.f32 %v698, 0.044715
      %v715 = vmul.f32 %v699, 0.044715
      %v716 = vadd.f32 %v652, %v700
      %v717 = vadd.f32 %v653, %v701
      %v718 = vadd.f32 %v654, %v702
      %v719 = vadd.f32 %v655, %v703
      %v720 = vadd.f32 %v656, %v704
      %v721 = vadd.f32 %v657, %v705
      %v722 = vadd.f32 %v658, %v706
      %v723 = vadd.f32 %v659, %v707
      %v724 = vadd.f32 %v660, %v708
      %v725 = vadd.f32 %v661, %v709
      %v726 = vadd.f32 %v662, %v710
      %v727 = vadd.f32 %v663, %v711
      %v728 = vadd.f32 %v664, %v712
      %v729 = vadd.f32 %v665, %v713
      %v730 = vadd.f32 %v666, %v714
      %v731 = vadd.f32 %v667, %v715
      %v732 = vmul.f32 %v716, 0.7978846
      %v733 = vmul.f32 %v717, 0.7978846
      %v734 = vmul.f32 %v718, 0.7978846
      %v735 = vmul.f32 %v719, 0.7978846
      %v736 = vmul.f32 %v720, 0.7978846
      %v737 = vmul.f32 %v721, 0.7978846
      %v738 = vmul.f32 %v722, 0.7978846
      %v739 = vmul.f32 %v723, 0.7978846
      %v740 = vmul.f32 %v724, 0.7978846
      %v741 = vmul.f32 %v725, 0.7978846
      %v742 = vmul.f32 %v726, 0.7978846
      %v743 = vmul.f32 %v727, 0.7978846
      %v744 = vmul.f32 %v728, 0.7978846
      %v745 = vmul.f32 %v729, 0.7978846
      %v746 = vmul.f32 %v730, 0.7978846
      %v747 = vmul.f32 %v731, 0.7978846
      %v748 = vtanh.pop %v732
      %v749 = vtanh.pop %v733
      %v750 = vtanh.pop %v734
      %v751 = vtanh.pop %v735
      %v752 = vtanh.pop %v736
      %v753 = vtanh.pop %v737
      %v754 = vtanh.pop %v738
      %v755 = vtanh.pop %v739
      %v756 = vtanh.pop %v740
      %v757 = vtanh.pop %v741
      %v758 = vtanh.pop %v742
      %v759 = vtanh.pop %v743
      %v760 = vtanh.pop %v744
      %v761 = vtanh.pop %v745
      %v762 = vtanh.pop %v746
      %v763 = vtanh.pop %v747
      %v764 = vadd.f32 %v748, 1.0
      %v765 = vadd.f32 %v749, 1.0
      %v766 = vadd.f32 %v750, 1.0
      %v767 = vadd.f32 %v751, 1.0
      %v768 = vadd.f32 %v752, 1.0
      %v769 = vadd.f32 %v753, 1.0
      %v770 = vadd.f32 %v754, 1.0
      %v771 = vadd.f32 %v755, 1.0
      %v772 = vadd.f32 %v756, 1.0
      %v773 = vadd.f32 %v757, 1.0
      %v774 = vadd.f32 %v758, 1.0
      %v775 = vadd.f32 %v759, 1.0
      %v776 = vadd.f32 %v760, 1.0
      %v777 = vadd.f32 %v761, 1.0
      %v778 = vadd.f32 %v762, 1.0
      %v779 = vadd.f32 %v763, 1.0
      %v780 = vmul.f32 %v764, 0.5
      %v781 = vmul.f32 %v765, 0.5
      %v782 = vmul.f32 %v766, 0.5
      %v783 = vmul.f32 %v767, 0.5
      %v784 = vmul.f32 %v768, 0.5
      %v785 = vmul.f32 %v769, 0.5
      %v786 = vmul.f32 %v770, 0.5
      %v787 = vmul.f32 %v771, 0.5
      %v788 = vmul.f32 %v772, 0.5
      %v789 = vmul.f32 %v773, 0.5
      %v790 = vmul.f32 %v774, 0.5
      %v791 = vmul.f32 %v775, 0.5
      %v792 = vmul.f32 %v776, 0.5
      %v793 = vmul.f32 %v777, 0.5
      %v794 = vmul.f32 %v778, 0.5
      %v795 = vmul.f32 %v779, 0.5
      %v796 = vmul.f32 %v652, %v780
      %v797 = vmul.f32 %v653, %v781
      %v798 = vmul.f32 %v654, %v782
      %v799 = vmul.f32 %v655, %v783
      %v800 = vmul.f32 %v656, %v784
      %v801 = vmul.f32 %v657, %v785
      %v802 = vmul.f32 %v658, %v786
      %v803 = vmul.f32 %v659, %v787
      %v804 = vmul.f32 %v660, %v788
      %v805 = vmul.f32 %v661, %v789
      %v806 = vmul.f32 %v662, %v790
      %v807 = vmul.f32 %v663, %v791
      %v808 = vmul.f32 %v664, %v792
      %v809 = vmul.f32 %v665, %v793
      %v810 = vmul.f32 %v666, %v794
      %v811 = vmul.f32 %v667, %v795
      %v812 = vpack.c.bf16 %v797, %v796
      %v813 = vpack.c.bf16 %v799, %v798
      %v814 = vpack.c.bf16 %v801, %v800
      %v815 = vpack.c.bf16 %v803, %v802
      %v816 = vpack.c.bf16 %v805, %v804
      %v817 = vpack.c.bf16 %v807, %v806
      %v818 = vpack.c.bf16 %v809, %v808
      %v819 = vpack.c.bf16 %v811, %v810
      %v820 = vld [vmem:[%s321] sm:$0xff]
      %v821 = vld [vmem:[%s321 + $0x8] sm:$0xff]
      %v822 = vld [vmem:[%s321 + $0x10] sm:$0xff]
      %v823 = vld [vmem:[%s321 + $0x18] sm:$0xff]
      %v824 = vld [vmem:[%s321 + $0x20] sm:$0xff]
      %v825 = vld [vmem:[%s321 + $0x28] sm:$0xff]
      %v826 = vld [vmem:[%s321 + $0x30] sm:$0xff]
      %v827 = vld [vmem:[%s321 + $0x38] sm:$0xff]
      %v828 = vld [vmem:[%s321 + $0x40] sm:$0xff]
      %v829 = vld [vmem:[%s321 + $0x48] sm:$0xff]
      %v830 = vld [vmem:[%s321 + $0x50] sm:$0xff]
      %v831 = vld [vmem:[%s321 + $0x58] sm:$0xff]
      %v832 = vld [vmem:[%s321 + $0x60] sm:$0xff]
      %v833 = vld [vmem:[%s321 + $0x68] sm:$0xff]
      %v834 = vld [vmem:[%s321 + $0x70] sm:$0xff]
      %v835 = vld [vmem:[%s321 + $0x78] sm:$0xff]
      %837 = vset.pattern.permute.xlu0 0
      %838 = vperm.xlu0 %837, %v820
      %v839 = vpop.permute.xlu0 %838
      %842 = vset.pattern.permute.xlu0 0
      %843 = vperm.xlu0 %842, %v821
      %v844 = vpop.permute.xlu0 %843
      %847 = vset.pattern.permute.xlu0 0
      %848 = vperm.xlu0 %847, %v822
      %v849 = vpop.permute.xlu0 %848
      %852 = vset.pattern.permute.xlu0 0
      %853 = vperm.xlu0 %852, %v823
      %v854 = vpop.permute.xlu0 %853
      %857 = vset.pattern.permute.xlu0 0
      %858 = vperm.xlu0 %857, %v824
      %v859 = vpop.permute.xlu0 %858
      %862 = vset.pattern.permute.xlu0 0
      %863 = vperm.xlu0 %862, %v825
      %v864 = vpop.permute.xlu0 %863
      %867 = vset.pattern.permute.xlu0 0
      %868 = vperm.xlu0 %867, %v826
      %v869 = vpop.permute.xlu0 %868
      %872 = vset.pattern.permute.xlu0 0
      %873 = vperm.xlu0 %872, %v827
      %v874 = vpop.permute.xlu0 %873
      %877 = vset.pattern.permute.xlu0 0
      %878 = vperm.xlu0 %877, %v828
      %v879 = vpop.permute.xlu0 %878
      %882 = vset.pattern.permute.xlu0 0
      %883 = vperm.xlu0 %882, %v829
      %v884 = vpop.permute.xlu0 %883
      %887 = vset.pattern.permute.xlu0 0
      %888 = vperm.xlu0 %887, %v830
      %v889 = vpop.permute.xlu0 %888
      %892 = vset.pattern.permute.xlu0 0
      %893 = vperm.xlu0 %892, %v831
      %v894 = vpop.permute.xlu0 %893
      %897 = vset.pattern.permute.xlu0 0
      %898 = vperm.xlu0 %897, %v832
      %v899 = vpop.permute.xlu0 %898
      %902 = vset.pattern.permute.xlu0 0
      %903 = vperm.xlu0 %902, %v833
      %v904 = vpop.permute.xlu0 %903
      %907 = vset.pattern.permute.xlu0 0
      %908 = vperm.xlu0 %907, %v834
      %v909 = vpop.permute.xlu0 %908
      %912 = vset.pattern.permute.xlu0 0
      %913 = vperm.xlu0 %912, %v835
      %v914 = vpop.permute.xlu0 %913
      %v916 = vadd.f32 %v494, %v839
      %v917 = vadd.f32 %v497, %v844
      %v918 = vadd.f32 %v502, %v849
      %v919 = vadd.f32 %v505, %v854
      %v920 = vadd.f32 %v510, %v859
      %v921 = vadd.f32 %v513, %v864
      %v922 = vadd.f32 %v518, %v869
      %v923 = vadd.f32 %v521, %v874
      %v924 = vadd.f32 %v526, %v879
      %v925 = vadd.f32 %v529, %v884
      %v926 = vadd.f32 %v534, %v889
      %v927 = vadd.f32 %v537, %v894
      %v928 = vadd.f32 %v542, %v899
      %v929 = vadd.f32 %v545, %v904
      %v930 = vadd.f32 %v550, %v909
      %v931 = vadd.f32 %v553, %v914
      %v932 = vmul.f32 %v916, %v916
      %v933 = vmul.f32 %v917, %v917
      %v934 = vmul.f32 %v918, %v918
      %v935 = vmul.f32 %v919, %v919
      %v936 = vmul.f32 %v920, %v920
      %v937 = vmul.f32 %v921, %v921
      %v938 = vmul.f32 %v922, %v922
      %v939 = vmul.f32 %v923, %v923
      %v940 = vmul.f32 %v924, %v924
      %v941 = vmul.f32 %v925, %v925
      %v942 = vmul.f32 %v926, %v926
      %v943 = vmul.f32 %v927, %v927
      %v944 = vmul.f32 %v928, %v928
      %v945 = vmul.f32 %v929, %v929
      %v946 = vmul.f32 %v930, %v930
      %v947 = vmul.f32 %v931, %v931
      %v948 = vmul.f32 %v916, %v932
      %v949 = vmul.f32 %v917, %v933
      %v950 = vmul.f32 %v918, %v934
      %v951 = vmul.f32 %v919, %v935
      %v952 = vmul.f32 %v920, %v936
      %v953 = vmul.f32 %v921, %v937
      %v954 = vmul.f32 %v922, %v938
      %v955 = vmul.f32 %v923, %v939
      %v956 = vmul.f32 %v924, %v940
      %v957 = vmul.f32 %v925, %v941
      %v958 = vmul.f32 %v926, %v942
      %v959 = vmul.f32 %v927, %v943
      %v960 = vmul.f32 %v928, %v944
      %v961 = vmul.f32 %v929, %v945
      %v962 = vmul.f32 %v930, %v946
      %v963 = vmul.f32 %v931, %v947
      %v964 = vmul.f32 %v948, 0.044715
      %v965 = vmul.f32 %v949, 0.044715
      %v966 = vmul.f32 %v950, 0.044715
      %v967 = vmul.f32 %v951, 0.044715
      %v968 = vmul.f32 %v952, 0.044715
      %v969 = vmul.f32 %v953, 0.044715
      %v970 = vmul.f32 %v954, 0.044715
      %v971 = vmul.f32 %v955, 0.044715
      %v972 = vmul.f32 %v956, 0.044715
      %v973 = vmul.f32 %v957, 0.044715
      %v974 = vmul.f32 %v958, 0.044715
      %v975 = vmul.f32 %v959, 0.044715
      %v976 = vmul.f32 %v960, 0.044715
      %v977 = vmul.f32 %v961, 0.044715
      %v978 = vmul.f32 %v962, 0.044715
      %v979 = vmul.f32 %v963, 0.044715
      %v980 = vadd.f32 %v916, %v964
      %v981 = vadd.f32 %v917, %v965
      %v982 = vadd.f32 %v918, %v966
      %v983 = vadd.f32 %v919, %v967
      %v984 = vadd.f32 %v920, %v968
      %v985 = vadd.f32 %v921, %v969
      %v986 = vadd.f32 %v922, %v970
      %v987 = vadd.f32 %v923, %v971
      %v988 = vadd.f32 %v924, %v972
      %v989 = vadd.f32 %v925, %v973
      %v990 = vadd.f32 %v926, %v974
      %v991 = vadd.f32 %v927, %v975
      %v992 = vadd.f32 %v928, %v976
      %v993 = vadd.f32 %v929, %v977
      %v994 = vadd.f32 %v930, %v978
      %v995 = vadd.f32 %v931, %v979
      %v996 = vmul.f32 %v980, 0.7978846
      %v997 = vmul.f32 %v981, 0.7978846
      %v998 = vmul.f32 %v982, 0.7978846
      %v999 = vmul.f32 %v983, 0.7978846
      %v1000 = vmul.f32 %v984, 0.7978846
      %v1001 = vmul.f32 %v985, 0.7978846
      %v1002 = vmul.f32 %v986, 0.7978846
      %v1003 = vmul.f32 %v987, 0.7978846
      %v1004 = vmul.f32 %v988, 0.7978846
      %v1005 = vmul.f32 %v989, 0.7978846
      %v1006 = vmul.f32 %v990, 0.7978846
      %v1007 = vmul.f32 %v991, 0.7978846
      %v1008 = vmul.f32 %v992, 0.7978846
      %v1009 = vmul.f32 %v993, 0.7978846
      %v1010 = vmul.f32 %v994, 0.7978846
      %v1011 = vmul.f32 %v995, 0.7978846
      %v1012 = vtanh.pop %v996
      %v1013 = vtanh.pop %v997
      %v1014 = vtanh.pop %v998
      %v1015 = vtanh.pop %v999
      %v1016 = vtanh.pop %v1000
      %v1017 = vtanh.pop %v1001
      %v1018 = vtanh.pop %v1002
      %v1019 = vtanh.pop %v1003
      %v1020 = vtanh.pop %v1004
      %v1021 = vtanh.pop %v1005
      %v1022 = vtanh.pop %v1006
      %v1023 = vtanh.pop %v1007
      %v1024 = vtanh.pop %v1008
      %v1025 = vtanh.pop %v1009
      %v1026 = vtanh.pop %v1010
      %v1027 = vtanh.pop %v1011
      %v1028 = vadd.f32 %v1012, 1.0
      %v1029 = vadd.f32 %v1013, 1.0
      %v1030 = vadd.f32 %v1014, 1.0
      %v1031 = vadd.f32 %v1015, 1.0
      %v1032 = vadd.f32 %v1016, 1.0
      %v1033 = vadd.f32 %v1017, 1.0
      %v1034 = vadd.f32 %v1018, 1.0
      %v1035 = vadd.f32 %v1019, 1.0
      %v1036 = vadd.f32 %v1020, 1.0
      %v1037 = vadd.f32 %v1021, 1.0
      %v1038 = vadd.f32 %v1022, 1.0
      %v1039 = vadd.f32 %v1023, 1.0
      %v1040 = vadd.f32 %v1024, 1.0
      %v1041 = vadd.f32 %v1025, 1.0
      %v1042 = vadd.f32 %v1026, 1.0
      %v1043 = vadd.f32 %v1027, 1.0
      %v1044 = vmul.f32 %v1028, 0.5
      %v1045 = vmul.f32 %v1029, 0.5
      %v1046 = vmul.f32 %v1030, 0.5
      %v1047 = vmul.f32 %v1031, 0.5
      %v1048 = vmul.f32 %v1032, 0.5
      %v1049 = vmul.f32 %v1033, 0.5
      %v1050 = vmul.f32 %v1034, 0.5
      %v1051 = vmul.f32 %v1035, 0.5
      %v1052 = vmul.f32 %v1036, 0.5
      %v1053 = vmul.f32 %v1037, 0.5
      %v1054 = vmul.f32 %v1038, 0.5
      %v1055 = vmul.f32 %v1039, 0.5
      %v1056 = vmul.f32 %v1040, 0.5
      %v1057 = vmul.f32 %v1041, 0.5
      %v1058 = vmul.f32 %v1042, 0.5
      %v1059 = vmul.f32 %v1043, 0.5
      %v1060 = vmul.f32 %v916, %v1044
      %v1061 = vmul.f32 %v917, %v1045
      %v1062 = vmul.f32 %v918, %v1046
      %v1063 = vmul.f32 %v919, %v1047
      %v1064 = vmul.f32 %v920, %v1048
      %v1065 = vmul.f32 %v921, %v1049
      %v1066 = vmul.f32 %v922, %v1050
      %v1067 = vmul.f32 %v923, %v1051
      %v1068 = vmul.f32 %v924, %v1052
      %v1069 = vmul.f32 %v925, %v1053
      %v1070 = vmul.f32 %v926, %v1054
      %v1071 = vmul.f32 %v927, %v1055
      %v1072 = vmul.f32 %v928, %v1056
      %v1073 = vmul.f32 %v929, %v1057
      %v1074 = vmul.f32 %v930, %v1058
      %v1075 = vmul.f32 %v931, %v1059
      %v1076 = vpack.c.bf16 %v1061, %v1060
      %v1077 = vpack.c.bf16 %v1063, %v1062
      %v1078 = vpack.c.bf16 %v1065, %v1064
      %v1079 = vpack.c.bf16 %v1067, %v1066
      %v1080 = vpack.c.bf16 %v1069, %v1068
      %v1081 = vpack.c.bf16 %v1071, %v1070
      %v1082 = vpack.c.bf16 %v1073, %v1072
      %v1083 = vpack.c.bf16 %v1075, %v1074
      %s1084 = sld [smem:[#allocation3 + %s28]]
      %v1085 = vunpack.c.l.bf16 %v812
      %v1086 = vunpack.c.h.bf16 %v812
      %v1087 = vunpack.c.l.bf16 %v813
      %v1088 = vunpack.c.h.bf16 %v813
      %v1089 = vunpack.c.l.bf16 %v814
      %v1090 = vunpack.c.h.bf16 %v814
      %v1091 = vunpack.c.l.bf16 %v815
      %v1092 = vunpack.c.h.bf16 %v815
      %v1093 = vunpack.c.l.bf16 %v816
      %v1094 = vunpack.c.h.bf16 %v816
      %v1095 = vunpack.c.l.bf16 %v817
      %v1096 = vunpack.c.h.bf16 %v817
      %v1097 = vunpack.c.l.bf16 %v818
      %v1098 = vunpack.c.h.bf16 %v818
      %v1099 = vunpack.c.l.bf16 %v819
      %v1100 = vunpack.c.h.bf16 %v819
      %v1101 = vunpack.c.l.bf16 %v1076
      %v1102 = vunpack.c.h.bf16 %v1076
      %v1103 = vunpack.c.l.bf16 %v1077
      %v1104 = vunpack.c.h.bf16 %v1077
      %v1105 = vunpack.c.l.bf16 %v1078
      %v1106 = vunpack.c.h.bf16 %v1078
      %v1107 = vunpack.c.l.bf16 %v1079
      %v1108 = vunpack.c.h.bf16 %v1079
      %v1109 = vunpack.c.l.bf16 %v1080
      %v1110 = vunpack.c.h.bf16 %v1080
      %v1111 = vunpack.c.l.bf16 %v1081
      %v1112 = vunpack.c.h.bf16 %v1081
      %v1113 = vunpack.c.l.bf16 %v1082
      %v1114 = vunpack.c.h.bf16 %v1082
      %v1115 = vunpack.c.l.bf16 %v1083
      %v1116 = vunpack.c.h.bf16 %v1083
      %v1117 = vsub.f32 %v1101, %v1085
      %v1118 = vsub.f32 %v1102, %v1086
      %v1119 = vsub.f32 %v1103, %v1087
      %v1120 = vsub.f32 %v1104, %v1088
      %v1121 = vsub.f32 %v1105, %v1089
      %v1122 = vsub.f32 %v1106, %v1090
      %v1123 = vsub.f32 %v1107, %v1091
      %v1124 = vsub.f32 %v1108, %v1092
      %v1125 = vsub.f32 %v1109, %v1093
      %v1126 = vsub.f32 %v1110, %v1094
      %v1127 = vsub.f32 %v1111, %v1095
      %v1128 = vsub.f32 %v1112, %v1096
      %v1129 = vsub.f32 %v1113, %v1097
      %v1130 = vsub.f32 %v1114, %v1098
      %v1131 = vsub.f32 %v1115, %v1099
      %v1132 = vsub.f32 %v1116, %v1100
      %v1133 = vstv %s1084
      %v1134 = vmul.f32 %v1133, %v1117
      %v1135 = vmul.f32 %v1133, %v1118
      %v1136 = vmul.f32 %v1133, %v1119
      %v1137 = vmul.f32 %v1133, %v1120
      %v1138 = vmul.f32 %v1133, %v1121
      %v1139 = vmul.f32 %v1133, %v1122
      %v1140 = vmul.f32 %v1133, %v1123
      %v1141 = vmul.f32 %v1133, %v1124
      %v1142 = vmul.f32 %v1133, %v1125
      %v1143 = vmul.f32 %v1133, %v1126
      %v1144 = vmul.f32 %v1133, %v1127
      %v1145 = vmul.f32 %v1133, %v1128
      %v1146 = vmul.f32 %v1133, %v1129
      %v1147 = vmul.f32 %v1133, %v1130
      %v1148 = vmul.f32 %v1133, %v1131
      %v1149 = vmul.f32 %v1133, %v1132
      %v1150 = vadd.f32 %v1085, %v1134
      %v1151 = vadd.f32 %v1086, %v1135
      %v1152 = vadd.f32 %v1087, %v1136
      %v1153 = vadd.f32 %v1088, %v1137
      %v1154 = vadd.f32 %v1089, %v1138
      %v1155 = vadd.f32 %v1090, %v1139
      %v1156 = vadd.f32 %v1091, %v1140
      %v1157 = vadd.f32 %v1092, %v1141
      %v1158 = vadd.f32 %v1093, %v1142
      %v1159 = vadd.f32 %v1094, %v1143
      %v1160 = vadd.f32 %v1095, %v1144
      %v1161 = vadd.f32 %v1096, %v1145
      %v1162 = vadd.f32 %v1097, %v1146
      %v1163 = vadd.f32 %v1098, %v1147
      %v1164 = vadd.f32 %v1099, %v1148
      %v1165 = vadd.f32 %v1100, %v1149
      %v1166 = vld [vmem:[%s5] sm:$0xf]
      %v1167 = vld [vmem:[%s5 + $0x4] sm:$0xf]
      %v1168 = vld [vmem:[%s5 + $0x8] sm:$0xf]
      %v1169 = vld [vmem:[%s5 + $0xc] sm:$0xf]
      %v1170 = vld [vmem:[%s5 + $0x10] sm:$0xf]
      %v1171 = vld [vmem:[%s5 + $0x14] sm:$0xf]
      %v1172 = vld [vmem:[%s5 + $0x18] sm:$0xf]
      %v1173 = vld [vmem:[%s5 + $0x1c] sm:$0xf]
      %v1174 = vld [vmem:[%s5 + $0x20] sm:$0xf]
      %v1175 = vld [vmem:[%s5 + $0x24] sm:$0xf]
      %v1176 = vld [vmem:[%s5 + $0x28] sm:$0xf]
      %v1177 = vld [vmem:[%s5 + $0x2c] sm:$0xf]
      %v1178 = vld [vmem:[%s5 + $0x30] sm:$0xf]
      %v1179 = vld [vmem:[%s5 + $0x34] sm:$0xf]
      %v1180 = vld [vmem:[%s5 + $0x38] sm:$0xf]
      %v1181 = vld [vmem:[%s5 + $0x3c] sm:$0xf]
      %v1182 = vpack.c.bf16 %v1151, %v1150
      %v1183 = vpack.c.bf16 %v1153, %v1152
      %v1184 = vpack.c.bf16 %v1155, %v1154
      %v1185 = vpack.c.bf16 %v1157, %v1156
      %v1186 = vpack.c.bf16 %v1159, %v1158
      %v1187 = vpack.c.bf16 %v1161, %v1160
      %v1188 = vpack.c.bf16 %v1163, %v1162
      %v1189 = vpack.c.bf16 %v1165, %v1164
      %v1190 = vld [vmem:[%s6] sm:$0xff]
      %v1191 = vld [vmem:[%s6 + $0x8] sm:$0xff]
      %v1192 = vld [vmem:[%s6 + $0x10] sm:$0xff]
      %v1193 = vld [vmem:[%s6 + $0x18] sm:$0xff]
      %v1194 = vld [vmem:[%s6 + $0x20] sm:$0xff]
      %v1195 = vld [vmem:[%s6 + $0x28] sm:$0xff]
      %v1196 = vld [vmem:[%s6 + $0x30] sm:$0xff]
      %v1197 = vld [vmem:[%s6 + $0x38] sm:$0xff]
      %v1198 = vld [vmem:[%s6 + $0x40] sm:$0xff]
      %v1199 = vld [vmem:[%s6 + $0x48] sm:$0xff]
      %v1200 = vld [vmem:[%s6 + $0x50] sm:$0xff]
      %v1201 = vld [vmem:[%s6 + $0x58] sm:$0xff]
      %v1202 = vld [vmem:[%s6 + $0x60] sm:$0xff]
      %v1203 = vld [vmem:[%s6 + $0x68] sm:$0xff]
      %v1204 = vld [vmem:[%s6 + $0x70] sm:$0xff]
      %v1205 = vld [vmem:[%s6 + $0x78] sm:$0xff]
      %1207 = vset.pattern.permute.xlu0 0
      %1208 = vperm.xlu0 %1207, %v1190
      %v1209 = vpop.permute.xlu0 %1208
      %1212 = vset.pattern.permute.xlu0 0
      %1213 = vperm.xlu0 %1212, %v1191
      %v1214 = vpop.permute.xlu0 %1213
      %1217 = vset.pattern.permute.xlu0 0
      %1218 = vperm.xlu0 %1217, %v1192
      %v1219 = vpop.permute.xlu0 %1218
      %1222 = vset.pattern.permute.xlu0 0
      %1223 = vperm.xlu0 %1222, %v1193
      %v1224 = vpop.permute.xlu0 %1223
      %1227 = vset.pattern.permute.xlu0 0
      %1228 = vperm.xlu0 %1227, %v1194
      %v1229 = vpop.permute.xlu0 %1228
      %1232 = vset.pattern.permute.xlu0 0
      %1233 = vperm.xlu0 %1232, %v1195
      %v1234 = vpop.permute.xlu0 %1233
      %1237 = vset.pattern.permute.xlu0 0
      %1238 = vperm.xlu0 %1237, %v1196
      %v1239 = vpop.permute.xlu0 %1238
      %1242 = vset.pattern.permute.xlu0 0
      %1243 = vperm.xlu0 %1242, %v1197
      %v1244 = vpop.permute.xlu0 %1243
      %1247 = vset.pattern.permute.xlu0 0
      %1248 = vperm.xlu0 %1247, %v1198
      %v1249 = vpop.permute.xlu0 %1248
      %1252 = vset.pattern.permute.xlu0 0
      %1253 = vperm.xlu0 %1252, %v1199
      %v1254 = vpop.permute.xlu0 %1253
      %1257 = vset.pattern.permute.xlu0 0
      %1258 = vperm.xlu0 %1257, %v1200
      %v1259 = vpop.permute.xlu0 %1258
      %1262 = vset.pattern.permute.xlu0 0
      %1263 = vperm.xlu0 %1262, %v1201
      %v1264 = vpop.permute.xlu0 %1263
      %1267 = vset.pattern.permute.xlu0 0
      %1268 = vperm.xlu0 %1267, %v1202
      %v1269 = vpop.permute.xlu0 %1268
      %1272 = vset.pattern.permute.xlu0 0
      %1273 = vperm.xlu0 %1272, %v1203
      %v1274 = vpop.permute.xlu0 %1273
      %1277 = vset.pattern.permute.xlu0 0
      %1278 = vperm.xlu0 %1277, %v1204
      %v1279 = vpop.permute.xlu0 %1278
      %1282 = vset.pattern.permute.xlu0 0
      %1283 = vperm.xlu0 %1282, %v1205
      %v1284 = vpop.permute.xlu0 %1283
      %v1302 = vunpack.c.l.b16 %v1166
      %v1303 = vunpack.c.l.b16 %v1167
      %v1304 = vunpack.c.l.b16 %v1168
      %v1305 = vunpack.c.l.b16 %v1169
      %v1306 = vunpack.c.l.b16 %v1170
      %v1307 = vunpack.c.l.b16 %v1171
      %v1308 = vunpack.c.l.b16 %v1172
      %v1309 = vunpack.c.l.b16 %v1173
      %v1310 = vunpack.c.l.b16 %v1174
      %v1311 = vunpack.c.l.b16 %v1175
      %v1312 = vunpack.c.l.b16 %v1176
      %v1313 = vunpack.c.l.b16 %v1177
      %v1314 = vunpack.c.l.b16 %v1178
      %v1315 = vunpack.c.l.b16 %v1179
      %v1316 = vunpack.c.l.b16 %v1180
      %v1317 = vunpack.c.l.b16 %v1181
      %v1318 = vpack.c.b16 %v1303, %v1302
      %v1319 = vpack.c.b16 %v1305, %v1304
      %v1320 = vpack.c.b16 %v1307, %v1306
      %v1321 = vpack.c.b16 %v1309, %v1308
      %v1322 = vpack.c.b16 %v1311, %v1310
      %v1323 = vpack.c.b16 %v1313, %v1312
      %v1324 = vpack.c.b16 %v1315, %v1314
      %v1325 = vpack.c.b16 %v1317, %v1316
      %1334 = vmatprep.subr.bf16.mxu0 0
      %1335 = vmatpush1.bf16.msra.mxu0 %v1182
      %1336 = vmatprep.subr.bf16.mxu0 0
      %1337 = vmatpush1.bf16.msra.mxu0 %v1183
      %1338 = vmatprep.subr.bf16.mxu0 0
      %1339 = vmatpush1.bf16.msra.mxu0 %v1184
      %1340 = vmatprep.subr.bf16.mxu0 0
      %1341 = vmatpush1.bf16.msra.mxu0 %v1185
      %1342 = vmatprep.subr.bf16.mxu0 0
      %1343 = vmatpush1.bf16.msra.mxu0 %v1186
      %1344 = vmatprep.subr.bf16.mxu0 0
      %1345 = vmatpush1.bf16.msra.mxu0 %v1187
      %1346 = vmatprep.subr.bf16.mxu0 0
      %1347 = vmatpush1.bf16.msra.mxu0 %v1188
      %1348 = vmatprep.subr.bf16.mxu0 0
      %1349 = vmatpush1.bf16.msra.mxu0 %v1189
      %1350 = vmatprep.subr.bf16.mxu0 0
      %1351 = vmatpush1.bf16.msra.mxu0 0
      %1352 = vmatprep.subr.bf16.mxu0 0
      %1353 = vmatpush1.bf16.msra.mxu0 0
      %1354 = vmatprep.subr.bf16.mxu0 0
      %1355 = vmatpush1.bf16.msra.mxu0 0
      %1356 = vmatprep.subr.bf16.mxu0 0
      %1357 = vmatpush1.bf16.msra.mxu0 0
      %1358 = vmatprep.subr.bf16.mxu0 0
      %1359 = vmatpush1.bf16.msra.mxu0 0
      %1360 = vmatprep.subr.bf16.mxu0 0
      %1361 = vmatpush1.bf16.msra.mxu0 0
      %1362 = vmatprep.subr.bf16.mxu0 0
      %1363 = vmatpush1.bf16.msra.mxu0 0
      %1364 = vmatprep.subr.bf16.mxu0 0
      %1365 = vmatpush1.bf16.msra.mxu0 0
      %1366 = vmatprep.mubr.bf16.mxu0 0
      %1367 = vmatmul.mubr.bf16.gmra.mrb[0].mxu0 %v1318
      %v1368 = vpop.f32.mrb[0].mxu0
      %v1369 = vadd.f32 %v1209, %v1368
      %v1370 = vpop.f32.mrb[0].mxu0
      %v1371 = vpop.f32.mrb[0].mxu0
      %v1372 = vadd.f32 %v1214, %v1371
      %v1373 = vpop.f32.mrb[0].mxu0
      %1374 = vmatprep.mubr.bf16.mxu0 0
      %1375 = vmatmul.mubr.bf16.gmra.mrb[0].mxu0 %v1319
      %v1376 = vpop.f32.mrb[0].mxu0
      %v1377 = vadd.f32 %v1219, %v1376
      %v1378 = vpop.f32.mrb[0].mxu0
      %v1379 = vpop.f32.mrb[0].mxu0
      %v1380 = vadd.f32 %v1224, %v1379
      %v1381 = vpop.f32.mrb[0].mxu0
      %1382 = vmatprep.mubr.bf16.mxu0 0
      %1383 = vmatmul.mubr.bf16.gmra.mrb[0].mxu0 %v1320
      %v1384 = vpop.f32.mrb[0].mxu0
      %v1385 = vadd.f32 %v1229, %v1384
      %v1386 = vpop.f32.mrb[0].mxu0
      %v1387 = vpop.f32.mrb[0].mxu0
      %v1388 = vadd.f32 %v1234, %v1387
      %v1389 = vpop.f32.mrb[0].mxu0
      %1390 = vmatprep.mubr.bf16.mxu0 0
      %1391 = vmatmul.mubr.bf16.gmra.mrb[0].mxu0 %v1321
      %v1392 = vpop.f32.mrb[0].mxu0
      %v1393 = vadd.f32 %v1239, %v1392
      %v1394 = vpop.f32.mrb[0].mxu0
      %v1395 = vpop.f32.mrb[0].mxu0
      %v1396 = vadd.f32 %v1244, %v1395
      %v1397 = vpop.f32.mrb[0].mxu0
      %1398 = vmatprep.mubr.bf16.mxu0 0
      %1399 = vmatmul.mubr.bf16.gmra.mrb[0].mxu0 %v1322
      %v1400 = vpop.f32.mrb[0].mxu0
      %v1401 = vadd.f32 %v1249, %v1400
      %v1402 = vpop.f32.mrb[0].mxu0
      %v1403 = vpop.f32.mrb[0].mxu0
      %v1404 = vadd.f32 %v1254, %v1403
      %v1405 = vpop.f32.mrb[0].mxu0
      %1406 = vmatprep.mubr.bf16.mxu0 0
      %1407 = vmatmul.mubr.bf16.gmra.mrb[0].mxu0 %v1323
      %v1408 = vpop.f32.mrb[0].mxu0
      %v1409 = vadd.f32 %v1259, %v1408
      %v1410 = vpop.f32.mrb[0].mxu0
      %v1411 = vpop.f32.mrb[0].mxu0
      %v1412 = vadd.f32 %v1264, %v1411
      %v1413 = vpop.f32.mrb[0].mxu0
      %1414 = vmatprep.mubr.bf16.mxu0 0
      %1415 = vmatmul.mubr.bf16.gmra.mrb[0].mxu0 %v1324
      %v1416 = vpop.f32.mrb[0].mxu0
      %v1417 = vadd.f32 %v1269, %v1416
      %v1418 = vpop.f32.mrb[0].mxu0
      %v1419 = vpop.f32.mrb[0].mxu0
      %v1420 = vadd.f32 %v1274, %v1419
      %v1421 = vpop.f32.mrb[0].mxu0
      %1422 = vmatprep.mubr.bf16.mxu0 0
      %1423 = vmatmul.mubr.bf16.gmra.mrb[0].mxu0 %v1325
      %v1424 = vpop.f32.mrb[0].mxu0
      %v1425 = vadd.f32 %v1279, %v1424
      %v1426 = vpop.f32.mrb[0].mxu0
      %v1427 = vpop.f32.mrb[0].mxu0
      %v1428 = vadd.f32 %v1284, %v1427
      %v1429 = vpop.f32.mrb[0].mxu0
      %1430 = vdwg.mxu0
      %1431 = vst [vmem:[%s329] sm:$0xff] %v1369
      %1432 = vst [vmem:[%s329 + $0x8] sm:$0xff] %v1372
      %1433 = vst [vmem:[%s329 + $0x10] sm:$0xff] %v1377
      %1434 = vst [vmem:[%s329 + $0x18] sm:$0xff] %v1380
      %1435 = vst [vmem:[%s329 + $0x20] sm:$0xff] %v1385
      %1436 = vst [vmem:[%s329 + $0x28] sm:$0xff] %v1388
      %1437 = vst [vmem:[%s329 + $0x30] sm:$0xff] %v1393
      %1438 = vst [vmem:[%s329 + $0x38] sm:$0xff] %v1396
      %1439 = vst [vmem:[%s329 + $0x40] sm:$0xff] %v1401
      %1440 = vst [vmem:[%s329 + $0x48] sm:$0xff] %v1404
      %1441 = vst [vmem:[%s329 + $0x50] sm:$0xff] %v1409
      %1442 = vst [vmem:[%s329 + $0x58] sm:$0xff] %v1412
      %1443 = vst [vmem:[%s329 + $0x60] sm:$0xff] %v1417
      %1444 = vst [vmem:[%s329 + $0x68] sm:$0xff] %v1420
      %1445 = vst [vmem:[%s329 + $0x70] sm:$0xff] %v1425
      %1446 = vst [vmem:[%s329 + $0x78] sm:$0xff] %v1428
      %p1447 = scmp.lt.s32.totalorder %s28, 1
      %s1448 = scalar_select %p1447, %s28, 1
      %p1449 = scmp.lt.s32.totalorder %s29, 0
      %s1450 = scalar_select %p1449, %s29, 0
      %s1451 = smul.addr %s1448, 16
      %s1452 = sadd.s32 %s1450, %s1451
      %s1453 = smul.addr %s1452, 8
      %s1454 = scalar_lea.vmem %s7, %s1453
      // Predicated region
      $region45: #{cfg_sample.1} parent=43 // pred_check
        %p1455 = pneg %p199
      $region46: #{cfg_sample.1} parent=43 // pred_check_branch
        %1457 = sbr.rel (%p1455) target = $region48
      $region47: #{cfg_sample.1} parent=43 // pred_region
        _
      $region48: #{cfg_sample.1} parent=43 // pred_fallthru
        _
    $region44: #{cfg_sample.1} parent=5 // pred_fallthru
      _
    %p1458 = scmp.le.s32.totalorder 2, %s19
    // Predicated region
    $region49: #{cfg_sample.1} parent=5 // pred_check
      %p1459 = pneg %p1458
    $region50: #{cfg_sample.1} parent=5 // pred_check_branch
      %1461 = sbr.rel (%p1459) target = $region52
    $region51: #{cfg_sample.1} parent=5 // pred_region
      %s1462 = ssub.s32 %s19, 2
      // Predicated region
      $region53: #{cfg_sample.1} parent=51 // pred_check
        %p1463 = pneg %p205
      $region54: #{cfg_sample.1} parent=51 // pred_check_branch
        %1465 = sbr.rel (%p1463) target = $region56
      $region55: #{cfg_sample.1} parent=51 // pred_region
        %p1466 = scmp.lt.s32.totalorder %s30, 1
        %s1467 = scalar_select %p1466, %s30, 1
        %p1468 = scmp.lt.s32.totalorder %s31, 0
        %s1469 = scalar_select %p1468, %s31, 0
        %s1470 = smul.addr %s1467, 16
        %s1471 = sadd.s32 %s1469, %s1470
        %s1472 = smul.addr %s1471, 8
        %s1473 = scalar_lea.vmem %s7, %s1472
      $region56: #{cfg_sample.1} parent=51 // pred_fallthru
        _
    $region52: #{cfg_sample.1} parent=5 // pred_fallthru
      _
  $region6: #{cfg_sample.1} parent=0 // loop_footer
    %s23 = sadd.s32 1, %s19
  $region7: #{cfg_sample.1} parent=0 // loop_footer_branch
    %18 = sbr.rel target = $region3
  $region8: #{cfg_sample.1} parent=0 // loop_exit
    _

</llo_original>
